<compile_context>
chip_gen: v7x
topology: tpu7x:2x2x1
jax: 0.10.0
libtpu: 0.0.40
codegen_flags: <defaults>
</compile_context>

<pallas_src>
import functools

import jax
import jax.numpy as jnp
from jax import lax
from jax.experimental import pallas as pl
from jax.experimental.pallas import tpu as pltpu


# ----------------------------------------------------------------------------- kernel

def _layer_norm(z, gamma, beta, eps=1e-5):
    mu = jnp.mean(z, axis=-1, keepdims=True)
    zc = z - mu
    var = jnp.mean(zc * zc, axis=-1, keepdims=True)
    return zc * lax.rsqrt(var + eps) * gamma + beta


def temporal_attention_kernel(x_ref, mask_ref,
                              wqkv_ref, bqkv_ref, wout_ref, bout_ref,
                              g1_ref, be1_ref,
                              wf1_ref, bf1_ref, wf2_ref, bf2_ref,
                              g2_ref, be2_ref,
                              y_ref, *attn_refs,
                              num_heads, need_weights):
    bb, T, E = x_ref.shape                       # batch-block, time, features
    H = num_heads
    n = bb * T

    x2 = x_ref[...].reshape(n, E)                # [bb*T, E]   (leading-dim merge, layout no-op)
    mask = mask_ref[...]                         # [H, E] 0/1 head membership

    # Fused QKV projection (Q scale already folded into wqkv/bqkv at trace time).
    qkv = jnp.dot(x2, wqkv_ref[...], preferred_element_type=jnp.float32) + bqkv_ref[...]
    q = qkv[:, :E].reshape(bb, T, E)
    k = qkv[:, E:2 * E].reshape(bb, T, E)
    v = qkv[:, 2 * E:].reshape(bb, T, E)

    # Head-separated scores via masked full-E contraction (no transposes, no dh-wide slices):
    #   s[b, h*T+i, j] = sum_e q[b,i,e] * mask[h,e] * k[b,j,e]  ==  q_h . k_h
    qm = (q[:, None, :, :] * mask[None, :, None, :]).reshape(bb, H * T, E)
    s = jnp.einsum('bme,bje->bmj', qm, k,
                   preferred_element_type=jnp.float32)                    # [bb, H*T, T]

    # Softmax over keys: one batched max/sum pass, EUP reciprocal.
    s = s - jnp.max(s, axis=-1, keepdims=True)
    e = jnp.exp(s)
    p = e * pl.reciprocal(jnp.sum(e, axis=-1, keepdims=True), approx=True)

    # Context for all heads at once, then fold heads back with the same mask.
    ctx_h = jnp.einsum('bmj,bje->bme', p, v,
                       preferred_element_type=jnp.float32)                # [bb, H*T, E]
    ctx = jnp.sum(ctx_h.reshape(bb, H, T, E) * mask[None, :, None, :], axis=1)   # [bb, T, E]

    # Single output projection + residual + LayerNorm 1.
    attn_out = jnp.dot(ctx.reshape(n, E), wout_ref[...],
                       preferred_element_type=jnp.float32) + bout_ref[...]
    h1 = _layer_norm(x2 + attn_out, g1_ref[...], be1_ref[...])

    # FFN: Linear -> ReLU -> (Dropout=identity) -> Linear -> (Dropout=identity)
    f = jnp.dot(h1, wf1_ref[...], preferred_element_type=jnp.float32) + bf1_ref[...]
    f = jnp.maximum(f, 0.0)
    f = jnp.dot(f, wf2_ref[...], preferred_element_type=jnp.float32) + bf2_ref[...]

    # Residual + LayerNorm 2.
    y = _layer_norm(h1 + f, g2_ref[...], be2_ref[...])
    y_ref[...] = y.astype(y_ref.dtype)                                    # [bb*T, E]

    if need_weights:
        attn = jnp.sum(p.reshape(bb, H, T, T), axis=1) * (1.0 / H)        # head-avg [bb, T, T]
        attn_refs[0][...] = attn.reshape(n, T).astype(attn_refs[0].dtype)  # [bb*T, T]


# ----------------------------------------------------------------------------- wrapper

def _prep_consts(params, num_heads):
    """Trace-time constant folding: transpose weights, reshape vectors to [1, N],
    fold the 1/sqrt(dh) query scale into the QKV projection, build the head mask."""
    E = params["ln1_gamma"].shape[0]
    dh = E // num_heads
    scale = 1.0 / (dh ** 0.5)
    row = lambda a: a.reshape(1, -1)

    qscale = jnp.concatenate([jnp.full((E,), scale, jnp.float32),
                              jnp.ones((2 * E,), jnp.float32)])
    wqkv = params["in_proj_weight"].T * qscale[None, :]                    # [E, 3E]
    bqkv = row(params["in_proj_bias"] * qscale)                            # [1, 3E]

    # mask[h, e] = 1 iff feature column e belongs to head h (contiguous head split).
    mask = (jnp.arange(E)[None, :] // dh
            == jnp.arange(num_heads)[:, None]).astype(jnp.float32)         # [H, E]

    return (
        mask, wqkv, bqkv,
        params["out_proj_weight"].T, row(params["out_proj_bias"]),          # [E, E], [1, E]
        row(params["ln1_gamma"]), row(params["ln1_beta"]),
        params["ffn_w1"].T, row(params["ffn_b1"]),                          # [E, 4E], [1, 4E]
        params["ffn_w2"].T, row(params["ffn_b2"]),                          # [4E, E], [1, E]
        row(params["ln2_gamma"]), row(params["ln2_beta"]),
    )


def temporal_attention_pallas(x, params, num_heads, need_weights=True, batch_block=None):
    """x: [B, T, E] (batch_first). Returns (y [B, T, E], attn_weights [B, T, T] or None).

    batch_block=None (default) fuses the whole batch into one grid step (best on single-TC
    v5e/v6e); batch_block=B//2 gives each v7x TensorCore one half of the batch.
    """
    B, T, E = x.shape
    bb = B if batch_block is None else batch_block
    assert B % bb == 0, "batch_block must divide batch"

    consts = _prep_consts(params, num_heads)
    kernel = functools.partial(temporal_attention_kernel,
                               num_heads=num_heads, need_weights=need_weights)

    const_spec = lambda c: pl.BlockSpec(c.shape, lambda i: (0, 0))

    out_shape = [jax.ShapeDtypeStruct((B * T, E), jnp.float32)]
    out_specs = [pl.BlockSpec((bb * T, E), lambda i: (i, 0))]
    if need_weights:
        out_shape.append(jax.ShapeDtypeStruct((B * T, T), jnp.float32))
        out_specs.append(pl.BlockSpec((bb * T, T), lambda i: (i, 0)))

    outs = pl.pallas_call(
        kernel,
        out_shape=tuple(out_shape),
        grid_spec=pltpu.PrefetchScalarGridSpec(
            num_scalar_prefetch=0,
            grid=(B // bb,),
            in_specs=[pl.BlockSpec((bb, T, E), lambda i: (i, 0, 0))]
                     + [const_spec(c) for c in consts],
            out_specs=tuple(out_specs),
        ),
        compiler_params=pltpu.CompilerParams(dimension_semantics=("parallel",)),
    )(x, *consts)

    y = outs[0].reshape(B, T, E)
    attn = outs[1].reshape(B, T, T) if need_weights else None
    return y, attn


# ----------------------------------------------------------------------------- params + reference

def make_params(key, embed_dim):
    E = embed_dim
    ks = jax.random.split(key, 8)
    s = 1.0 / (E ** 0.5)
    return dict(
        in_proj_weight=s * jax.random.normal(ks[0], (3 * E, E), jnp.float32),
        in_proj_bias=0.1 * jax.random.normal(ks[1], (3 * E,), jnp.float32),
        out_proj_weight=s * jax.random.normal(ks[2], (E, E), jnp.float32),
        out_proj_bias=0.1 * jax.random.normal(ks[3], (E,), jnp.float32),
        ln1_gamma=jnp.ones((E,), jnp.float32),
        ln1_beta=jnp.zeros((E,), jnp.float32),
        ffn_w1=s * jax.random.normal(ks[4], (4 * E, E), jnp.float32),
        ffn_b1=0.1 * jax.random.normal(ks[5], (4 * E,), jnp.float32),
        ffn_w2=(1.0 / (4 * E) ** 0.5) * jax.random.normal(ks[6], (E, 4 * E), jnp.float32),
        ffn_b2=0.1 * jax.random.normal(ks[7], (E,), jnp.float32),
        ln2_gamma=jnp.ones((E,), jnp.float32),
        ln2_beta=jnp.zeros((E,), jnp.float32),
    )


def reference_forward(x, params, num_heads):
    """Pure-JAX eval-mode reference matching nn.MultiheadAttention(batch_first=True) semantics."""
    B, T, E = x.shape
    dh = E // num_heads
    hp = lax.Precision.HIGHEST

    qkv = jnp.einsum("bte,fe->btf", x, params["in_proj_weight"], precision=hp) + params["in_proj_bias"]
    q, k, v = jnp.split(qkv, 3, axis=-1)
    split_heads = lambda z: z.reshape(B, T, num_heads, dh).transpose(0, 2, 1, 3)   # [B,H,T,dh]
    q, k, v = split_heads(q), split_heads(k), split_heads(v)

    s = jnp.einsum("bhqd,bhkd->bhqk", q, k, precision=hp) / (dh ** 0.5)
    p = jax.nn.softmax(s, axis=-1)
    ctx = jnp.einsum("bhqk,bhkd->bhqd", p, v, precision=hp)
    ctx = ctx.transpose(0, 2, 1, 3).reshape(B, T, E)
    attn_out = jnp.einsum("bte,fe->btf", ctx, params["out_proj_weight"], precision=hp) \
               + params["out_proj_bias"]

    def ln(z, g, b):
        mu = jnp.mean(z, -1, keepdims=True)
        var = jnp.mean((z - mu) ** 2, -1, keepdims=True)
        return (z - mu) / jnp.sqrt(var + 1e-5) * g + b

    h1 = ln(x + attn_out, params["ln1_gamma"], params["ln1_beta"])
    f = jnp.maximum(jnp.einsum("bte,fe->btf", h1, params["ffn_w1"], precision=hp)
                    + params["ffn_b1"], 0.0)
    f = jnp.einsum("btf,ef->bte", f, params["ffn_w2"], precision=hp) + params["ffn_b2"]
    y = ln(h1 + f, params["ln2_gamma"], params["ln2_beta"])

    attn_avg = jnp.mean(p, axis=1)   # PyTorch default: average over heads -> [B, T, T]
    return y, attn_avg


# ----------------------------------------------------------------------------- main

if __name__ == "__main__":
    key = jax.random.PRNGKey(0)
    B, T, E, H = 2, 16, 32, 8

    key, pk, xk = jax.random.split(key, 3)
    params = make_params(pk, embed_dim=E)
    x = jax.random.normal(xk, (B, T, E), dtype=jnp.float32)   # [batch, time, features]

    y, attn = temporal_attention_pallas(x, params, num_heads=H)
    y = jax.block_until_ready(y)
    attn = jax.block_until_ready(attn)

    y_ref, attn_ref = reference_forward(x, params, num_heads=H)
    y_ref = jax.block_until_ready(y_ref)
    attn_ref = jax.block_until_ready(attn_ref)

    assert y.shape == (B, T, E), y.shape
    assert attn.shape == (B, T, T), attn.shape
    assert jnp.allclose(y, y_ref, atol=2e-3, rtol=2e-3), float(jnp.max(jnp.abs(y - y_ref)))
    assert jnp.allclose(attn, attn_ref, atol=2e-3, rtol=2e-3), float(jnp.max(jnp.abs(attn - attn_ref)))
    print("KERNEL_OK")
</pallas_src>

<mosaic_0001>
module attributes {stable_mosaic.version = 11 : i64} {
  func.func @temporal_attention_kernel(%arg0: i32, %arg1: memref<2x16x32xf32, #tpu.memory_space<vmem>>, %arg2: memref<8x32xf32, #tpu.memory_space<vmem>>, %arg3: memref<32x96xf32, #tpu.memory_space<vmem>>, %arg4: memref<1x96xf32, #tpu.memory_space<vmem>>, %arg5: memref<32x32xf32, #tpu.memory_space<vmem>>, %arg6: memref<1x32xf32, #tpu.memory_space<vmem>>, %arg7: memref<1x32xf32, #tpu.memory_space<vmem>>, %arg8: memref<1x32xf32, #tpu.memory_space<vmem>>, %arg9: memref<32x128xf32, #tpu.memory_space<vmem>>, %arg10: memref<1x128xf32, #tpu.memory_space<vmem>>, %arg11: memref<128x32xf32, #tpu.memory_space<vmem>>, %arg12: memref<1x32xf32, #tpu.memory_space<vmem>>, %arg13: memref<1x32xf32, #tpu.memory_space<vmem>>, %arg14: memref<1x32xf32, #tpu.memory_space<vmem>>, %arg15: memref<32x32xf32, #tpu.memory_space<vmem>>, %arg16: memref<32x16xf32, #tpu.memory_space<vmem>>) attributes {dimension_semantics = [#tpu.dimension_semantics<parallel>], iteration_bounds = array<i64: 1>, scalar_prefetch = 0 : i64, scratch_operands = 0 : i64, tpu.core_type = #tpu.core_type<tc>, window_params = [{transform_indices = @transform_0, window_bounds = array<i64: 2, 16, 32>}, {pipeline_mode = #tpu.pipeline_mode<synchronous>, transform_indices = @transform_1, window_bounds = array<i64: 8, 32>}, {pipeline_mode = #tpu.pipeline_mode<synchronous>, transform_indices = @transform_2, window_bounds = array<i64: 32, 96>}, {pipeline_mode = #tpu.pipeline_mode<synchronous>, transform_indices = @transform_3, window_bounds = array<i64: 1, 96>}, {pipeline_mode = #tpu.pipeline_mode<synchronous>, transform_indices = @transform_4, window_bounds = array<i64: 32, 32>}, {pipeline_mode = #tpu.pipeline_mode<synchronous>, transform_indices = @transform_5, window_bounds = array<i64: 1, 32>}, {pipeline_mode = #tpu.pipeline_mode<synchronous>, transform_indices = @transform_6, window_bounds = array<i64: 1, 32>}, {pipeline_mode = #tpu.pipeline_mode<synchronous>, transform_indices = @transform_7, window_bounds = array<i64: 1, 32>}, {pipeline_mode = #tpu.pipeline_mode<synchronous>, transform_indices = @transform_8, window_bounds = array<i64: 32, 128>}, {pipeline_mode = #tpu.pipeline_mode<synchronous>, transform_indices = @transform_9, window_bounds = array<i64: 1, 128>}, {pipeline_mode = #tpu.pipeline_mode<synchronous>, transform_indices = @transform_10, window_bounds = array<i64: 128, 32>}, {pipeline_mode = #tpu.pipeline_mode<synchronous>, transform_indices = @transform_11, window_bounds = array<i64: 1, 32>}, {pipeline_mode = #tpu.pipeline_mode<synchronous>, transform_indices = @transform_12, window_bounds = array<i64: 1, 32>}, {pipeline_mode = #tpu.pipeline_mode<synchronous>, transform_indices = @transform_13, window_bounds = array<i64: 1, 32>}, {transform_indices = @transform_14, window_bounds = array<i64: 32, 32>}, {transform_indices = @transform_15, window_bounds = array<i64: 32, 16>}]} {
    %c0 = arith.constant 0 : index
    %c0_0 = arith.constant 0 : index
    %c0_1 = arith.constant 0 : index
    %0 = vector.load %arg1[%c0, %c0_0, %c0_1] : memref<2x16x32xf32, #tpu.memory_space<vmem>>, vector<2x16x32xf32>
    %1 = vector.shape_cast %0 : vector<2x16x32xf32> to vector<32x32xf32>
    %c0_2 = arith.constant 0 : index
    %c0_3 = arith.constant 0 : index
    %2 = vector.load %arg2[%c0_2, %c0_3] : memref<8x32xf32, #tpu.memory_space<vmem>>, vector<8x32xf32>
    %c0_4 = arith.constant 0 : index
    %c0_5 = arith.constant 0 : index
    %3 = vector.load %arg3[%c0_4, %c0_5] : memref<32x96xf32, #tpu.memory_space<vmem>>, vector<32x96xf32>
    %cst = arith.constant dense<0.000000e+00> : vector<32x96xf32>
    %4 = tpu.matmul %1, %3, %cst {dimension_numbers = #tpu.dot_dimension_numbers<[1], [0], [0], [1], [0, 0, 1, 1], [], []>} : vector<32x32xf32>, vector<32x96xf32>, vector<32x96xf32> -> vector<32x96xf32>
    %c0_6 = arith.constant 0 : index
    %c0_7 = arith.constant 0 : index
    %5 = vector.load %arg4[%c0_6, %c0_7] : memref<1x96xf32, #tpu.memory_space<vmem>>, vector<1x96xf32>
    %6 = vector.broadcast %5 : vector<1x96xf32> to vector<32x96xf32>
    %7 = arith.addf %4, %6 : vector<32x96xf32>
    %8 = vector.extract_strided_slice %7 {offsets = [0, 0], sizes = [32, 32], strides = [1, 1]} : vector<32x96xf32> to vector<32x32xf32>
    %9 = vector.shape_cast %8 : vector<32x32xf32> to vector<2x16x32xf32>
    %10 = vector.extract_strided_slice %7 {offsets = [0, 32], sizes = [32, 32], strides = [1, 1]} : vector<32x96xf32> to vector<32x32xf32>
    %11 = vector.shape_cast %10 : vector<32x32xf32> to vector<2x16x32xf32>
    %12 = vector.extract_strided_slice %7 {offsets = [0, 64], sizes = [32, 32], strides = [1, 1]} : vector<32x96xf32> to vector<32x32xf32>
    %13 = vector.shape_cast %12 : vector<32x32xf32> to vector<2x16x32xf32>
    %14 = vector.shape_cast %9 : vector<2x16x32xf32> to vector<2x1x16x32xf32>
    %15 = vector.shape_cast %2 : vector<8x32xf32> to vector<1x8x1x32xf32>
    %16 = vector.broadcast %14 : vector<2x1x16x32xf32> to vector<2x8x16x32xf32>
    %17 = vector.broadcast %15 : vector<1x8x1x32xf32> to vector<2x8x16x32xf32>
    %18 = arith.mulf %16, %17 : vector<2x8x16x32xf32>
    %19 = vector.shape_cast %18 : vector<2x8x16x32xf32> to vector<2x128x32xf32>
    "tpu.trace_start"() <{level = 10 : i32, message = "bme,bje->bmj"}> : () -> ()
    %cst_8 = arith.constant dense<0.000000e+00> : vector<2x128x16xf32>
    %20 = tpu.matmul %19, %11, %cst_8 {dimension_numbers = #tpu.dot_dimension_numbers<[2], [2], [1], [1], [0, 0, 0, 1, 1, 1], [0], [0]>} : vector<2x128x32xf32>, vector<2x16x32xf32>, vector<2x128x16xf32> -> vector<2x128x16xf32>
    "tpu.trace_stop"() : () -> ()
    %cst_9 = arith.constant dense<0xFF800000> : vector<2x128xf32>
    %21 = vector.multi_reduction <maximumf>, %20, %cst_9 [2] : vector<2x128x16xf32> to vector<2x128xf32>
    %22 = vector.shape_cast %21 : vector<2x128xf32> to vector<2x128x1xf32>
    %23 = vector.broadcast %22 : vector<2x128x1xf32> to vector<2x128x16xf32>
    %24 = arith.subf %20, %23 : vector<2x128x16xf32>
    %25 = math.exp %24 : vector<2x128x16xf32>
    %cst_10 = arith.constant dense<0.000000e+00> : vector<2x128xf32>
    %26 = vector.multi_reduction <add>, %25, %cst_10 [2] : vector<2x128x16xf32> to vector<2x128xf32>
    %27 = vector.shape_cast %26 : vector<2x128xf32> to vector<2x128x1xf32>
    %28 = tpu.reciprocal %27 {approx = true} : vector<2x128x1xf32> -> vector<2x128x1xf32>
    %29 = vector.broadcast %28 : vector<2x128x1xf32> to vector<2x128x16xf32>
    %30 = arith.mulf %25, %29 : vector<2x128x16xf32>
    "tpu.trace_start"() <{level = 10 : i32, message = "bmj,bje->bme"}> : () -> ()
    %cst_11 = arith.constant dense<0.000000e+00> : vector<2x128x32xf32>
    %31 = tpu.matmul %30, %13, %cst_11 {dimension_numbers = #tpu.dot_dimension_numbers<[2], [1], [1], [2], [0, 0, 0, 1, 1, 2], [0], [0]>} : vector<2x128x16xf32>, vector<2x16x32xf32>, vector<2x128x32xf32> -> vector<2x128x32xf32>
    "tpu.trace_stop"() : () -> ()
    %32 = vector.shape_cast %31 : vector<2x128x32xf32> to vector<2x8x16x32xf32>
    %33 = vector.shape_cast %2 : vector<8x32xf32> to vector<1x8x1x32xf32>
    %34 = vector.broadcast %33 : vector<1x8x1x32xf32> to vector<2x8x16x32xf32>
    %35 = arith.mulf %32, %34 : vector<2x8x16x32xf32>
    %cst_12 = arith.constant dense<0.000000e+00> : vector<2x16x32xf32>
    %36 = vector.multi_reduction <add>, %35, %cst_12 [1] : vector<2x8x16x32xf32> to vector<2x16x32xf32>
    %37 = vector.shape_cast %36 : vector<2x16x32xf32> to vector<32x32xf32>
    %c0_13 = arith.constant 0 : index
    %c0_14 = arith.constant 0 : index
    %38 = vector.load %arg5[%c0_13, %c0_14] : memref<32x32xf32, #tpu.memory_space<vmem>>, vector<32x32xf32>
    %cst_15 = arith.constant dense<0.000000e+00> : vector<32x32xf32>
    %39 = tpu.matmul %37, %38, %cst_15 {dimension_numbers = #tpu.dot_dimension_numbers<[1], [0], [0], [1], [0, 0, 1, 1], [], []>} : vector<32x32xf32>, vector<32x32xf32>, vector<32x32xf32> -> vector<32x32xf32>
    %c0_16 = arith.constant 0 : index
    %c0_17 = arith.constant 0 : index
    %40 = vector.load %arg6[%c0_16, %c0_17] : memref<1x32xf32, #tpu.memory_space<vmem>>, vector<1x32xf32>
    %41 = vector.broadcast %40 : vector<1x32xf32> to vector<32x32xf32>
    %42 = arith.addf %39, %41 : vector<32x32xf32>
    %43 = arith.addf %1, %42 : vector<32x32xf32>
    %c0_18 = arith.constant 0 : index
    %c0_19 = arith.constant 0 : index
    %44 = vector.load %arg7[%c0_18, %c0_19] : memref<1x32xf32, #tpu.memory_space<vmem>>, vector<1x32xf32>
    %c0_20 = arith.constant 0 : index
    %c0_21 = arith.constant 0 : index
    %45 = vector.load %arg8[%c0_20, %c0_21] : memref<1x32xf32, #tpu.memory_space<vmem>>, vector<1x32xf32>
    %cst_22 = arith.constant dense<0.000000e+00> : vector<32xf32>
    %46 = vector.multi_reduction <add>, %43, %cst_22 [1] : vector<32x32xf32> to vector<32xf32>
    %47 = vector.shape_cast %46 : vector<32xf32> to vector<32x1xf32>
    %cst_23 = arith.constant 3.200000e+01 : f32
    %48 = vector.broadcast %cst_23 : f32 to vector<32x1xf32>
    %49 = arith.divf %47, %48 : vector<32x1xf32>
    %50 = vector.broadcast %49 : vector<32x1xf32> to vector<32x32xf32>
    %51 = arith.subf %43, %50 : vector<32x32xf32>
    %52 = arith.mulf %51, %51 : vector<32x32xf32>
    %cst_24 = arith.constant dense<0.000000e+00> : vector<32xf32>
    %53 = vector.multi_reduction <add>, %52, %cst_24 [1] : vector<32x32xf32> to vector<32xf32>
    %54 = vector.shape_cast %53 : vector<32xf32> to vector<32x1xf32>
    %cst_25 = arith.constant 3.200000e+01 : f32
    %55 = vector.broadcast %cst_25 : f32 to vector<32x1xf32>
    %56 = arith.divf %54, %55 : vector<32x1xf32>
    %cst_26 = arith.constant 9.99999974E-6 : f32
    %57 = vector.broadcast %cst_26 : f32 to vector<32x1xf32>
    %58 = arith.addf %56, %57 : vector<32x1xf32>
    %59 = math.rsqrt %58 : vector<32x1xf32>
    %60 = vector.broadcast %59 : vector<32x1xf32> to vector<32x32xf32>
    %61 = arith.mulf %51, %60 : vector<32x32xf32>
    %62 = vector.broadcast %44 : vector<1x32xf32> to vector<32x32xf32>
    %63 = arith.mulf %61, %62 : vector<32x32xf32>
    %64 = vector.broadcast %45 : vector<1x32xf32> to vector<32x32xf32>
    %65 = arith.addf %63, %64 : vector<32x32xf32>
    %c0_27 = arith.constant 0 : index
    %c0_28 = arith.constant 0 : index
    %66 = vector.load %arg9[%c0_27, %c0_28] : memref<32x128xf32, #tpu.memory_space<vmem>>, vector<32x128xf32>
    %cst_29 = arith.constant dense<0.000000e+00> : vector<32x128xf32>
    %67 = tpu.matmul %65, %66, %cst_29 {dimension_numbers = #tpu.dot_dimension_numbers<[1], [0], [0], [1], [0, 0, 1, 1], [], []>} : vector<32x32xf32>, vector<32x128xf32>, vector<32x128xf32> -> vector<32x128xf32>
    %c0_30 = arith.constant 0 : index
    %c0_31 = arith.constant 0 : index
    %68 = vector.load %arg10[%c0_30, %c0_31] : memref<1x128xf32, #tpu.memory_space<vmem>>, vector<1x128xf32>
    %69 = vector.broadcast %68 : vector<1x128xf32> to vector<32x128xf32>
    %70 = arith.addf %67, %69 : vector<32x128xf32>
    %cst_32 = arith.constant 0.000000e+00 : f32
    %71 = vector.broadcast %cst_32 : f32 to vector<32x128xf32>
    %72 = arith.maximumf %70, %71 : vector<32x128xf32>
    %c0_33 = arith.constant 0 : index
    %c0_34 = arith.constant 0 : index
    %73 = vector.load %arg11[%c0_33, %c0_34] : memref<128x32xf32, #tpu.memory_space<vmem>>, vector<128x32xf32>
    %cst_35 = arith.constant dense<0.000000e+00> : vector<32x32xf32>
    %74 = tpu.matmul %72, %73, %cst_35 {dimension_numbers = #tpu.dot_dimension_numbers<[1], [0], [0], [1], [0, 0, 1, 1], [], []>} : vector<32x128xf32>, vector<128x32xf32>, vector<32x32xf32> -> vector<32x32xf32>
    %c0_36 = arith.constant 0 : index
    %c0_37 = arith.constant 0 : index
    %75 = vector.load %arg12[%c0_36, %c0_37] : memref<1x32xf32, #tpu.memory_space<vmem>>, vector<1x32xf32>
    %76 = vector.broadcast %75 : vector<1x32xf32> to vector<32x32xf32>
    %77 = arith.addf %74, %76 : vector<32x32xf32>
    %78 = arith.addf %65, %77 : vector<32x32xf32>
    %c0_38 = arith.constant 0 : index
    %c0_39 = arith.constant 0 : index
    %79 = vector.load %arg13[%c0_38, %c0_39] : memref<1x32xf32, #tpu.memory_space<vmem>>, vector<1x32xf32>
    %c0_40 = arith.constant 0 : index
    %c0_41 = arith.constant 0 : index
    %80 = vector.load %arg14[%c0_40, %c0_41] : memref<1x32xf32, #tpu.memory_space<vmem>>, vector<1x32xf32>
    %cst_42 = arith.constant dense<0.000000e+00> : vector<32xf32>
    %81 = vector.multi_reduction <add>, %78, %cst_42 [1] : vector<32x32xf32> to vector<32xf32>
    %82 = vector.shape_cast %81 : vector<32xf32> to vector<32x1xf32>
    %cst_43 = arith.constant 3.200000e+01 : f32
    %83 = vector.broadcast %cst_43 : f32 to vector<32x1xf32>
    %84 = arith.divf %82, %83 : vector<32x1xf32>
    %85 = vector.broadcast %84 : vector<32x1xf32> to vector<32x32xf32>
    %86 = arith.subf %78, %85 : vector<32x32xf32>
    %87 = arith.mulf %86, %86 : vector<32x32xf32>
    %cst_44 = arith.constant dense<0.000000e+00> : vector<32xf32>
    %88 = vector.multi_reduction <add>, %87, %cst_44 [1] : vector<32x32xf32> to vector<32xf32>
    %89 = vector.shape_cast %88 : vector<32xf32> to vector<32x1xf32>
    %cst_45 = arith.constant 3.200000e+01 : f32
    %90 = vector.broadcast %cst_45 : f32 to vector<32x1xf32>
    %91 = arith.divf %89, %90 : vector<32x1xf32>
    %cst_46 = arith.constant 9.99999974E-6 : f32
    %92 = vector.broadcast %cst_46 : f32 to vector<32x1xf32>
    %93 = arith.addf %91, %92 : vector<32x1xf32>
    %94 = math.rsqrt %93 : vector<32x1xf32>
    %95 = vector.broadcast %94 : vector<32x1xf32> to vector<32x32xf32>
    %96 = arith.mulf %86, %95 : vector<32x32xf32>
    %97 = vector.broadcast %79 : vector<1x32xf32> to vector<32x32xf32>
    %98 = arith.mulf %96, %97 : vector<32x32xf32>
    %99 = vector.broadcast %80 : vector<1x32xf32> to vector<32x32xf32>
    %100 = arith.addf %98, %99 : vector<32x32xf32>
    %c0_47 = arith.constant 0 : index
    %c0_48 = arith.constant 0 : index
    %101 = vector.load %arg15[%c0_47, %c0_48] : memref<32x32xf32, #tpu.memory_space<vmem>>, vector<32x32xf32>
    tpu.vector_store %arg15[%c0_47, %c0_48], %100 {strides = array<i32>} : memref<32x32xf32, #tpu.memory_space<vmem>>, vector<32x32xf32>,
    %102 = vector.shape_cast %30 : vector<2x128x16xf32> to vector<2x8x16x16xf32>
    %cst_49 = arith.constant dense<0.000000e+00> : vector<2x16x16xf32>
    %103 = vector.multi_reduction <add>, %102, %cst_49 [1] : vector<2x8x16x16xf32> to vector<2x16x16xf32>
    %cst_50 = arith.constant 1.250000e-01 : f32
    %104 = vector.broadcast %cst_50 : f32 to vector<2x16x16xf32>
    %105 = arith.mulf %103, %104 : vector<2x16x16xf32>
    %106 = vector.shape_cast %105 : vector<2x16x16xf32> to vector<32x16xf32>
    %c0_51 = arith.constant 0 : index
    %c0_52 = arith.constant 0 : index
    %107 = vector.load %arg16[%c0_51, %c0_52] : memref<32x16xf32, #tpu.memory_space<vmem>>, vector<32x16xf32>
    tpu.vector_store %arg16[%c0_51, %c0_52], %106 {strides = array<i32>} : memref<32x16xf32, #tpu.memory_space<vmem>>, vector<32x16xf32>,
    return
  }
  func.func @transform_0(%arg0: i32) -> (i32, i32, i32) {
    %c0_i32 = arith.constant 0 : i32
    %c0_i32_0 = arith.constant 0 : i32
    %c0_i32_1 = arith.constant 0 : i32
    return %arg0, %c0_i32, %c0_i32_0 : i32, i32, i32
  }
  func.func @transform_1(%arg0: i32) -> (i32, i32) {
    %c0_i32 = arith.constant 0 : i32
    %c0_i32_0 = arith.constant 0 : i32
    %c0_i32_1 = arith.constant 0 : i32
    return %c0_i32, %c0_i32_0 : i32, i32
  }
  func.func @transform_2(%arg0: i32) -> (i32, i32) {
    %c0_i32 = arith.constant 0 : i32
    %c0_i32_0 = arith.constant 0 : i32
    %c0_i32_1 = arith.constant 0 : i32
    return %c0_i32, %c0_i32_0 : i32, i32
  }
  func.func @transform_3(%arg0: i32) -> (i32, i32) {
    %c0_i32 = arith.constant 0 : i32
    %c0_i32_0 = arith.constant 0 : i32
    %c0_i32_1 = arith.constant 0 : i32
    return %c0_i32, %c0_i32_0 : i32, i32
  }
  func.func @transform_4(%arg0: i32) -> (i32, i32) {
    %c0_i32 = arith.constant 0 : i32
    %c0_i32_0 = arith.constant 0 : i32
    %c0_i32_1 = arith.constant 0 : i32
    return %c0_i32, %c0_i32_0 : i32, i32
  }
  func.func @transform_5(%arg0: i32) -> (i32, i32) {
    %c0_i32 = arith.constant 0 : i32
    %c0_i32_0 = arith.constant 0 : i32
    %c0_i32_1 = arith.constant 0 : i32
    return %c0_i32, %c0_i32_0 : i32, i32
  }
  func.func @transform_6(%arg0: i32) -> (i32, i32) {
    %c0_i32 = arith.constant 0 : i32
    %c0_i32_0 = arith.constant 0 : i32
    %c0_i32_1 = arith.constant 0 : i32
    return %c0_i32, %c0_i32_0 : i32, i32
  }
  func.func @transform_7(%arg0: i32) -> (i32, i32) {
    %c0_i32 = arith.constant 0 : i32
    %c0_i32_0 = arith.constant 0 : i32
    %c0_i32_1 = arith.constant 0 : i32
    return %c0_i32, %c0_i32_0 : i32, i32
  }
  func.func @transform_8(%arg0: i32) -> (i32, i32) {
    %c0_i32 = arith.constant 0 : i32
    %c0_i32_0 = arith.constant 0 : i32
    %c0_i32_1 = arith.constant 0 : i32
    return %c0_i32, %c0_i32_0 : i32, i32
  }
  func.func @transform_9(%arg0: i32) -> (i32, i32) {
    %c0_i32 = arith.constant 0 : i32
    %c0_i32_0 = arith.constant 0 : i32
    %c0_i32_1 = arith.constant 0 : i32
    return %c0_i32, %c0_i32_0 : i32, i32
  }
  func.func @transform_10(%arg0: i32) -> (i32, i32) {
    %c0_i32 = arith.constant 0 : i32
    %c0_i32_0 = arith.constant 0 : i32
    %c0_i32_1 = arith.constant 0 : i32
    return %c0_i32, %c0_i32_0 : i32, i32
  }
  func.func @transform_11(%arg0: i32) -> (i32, i32) {
    %c0_i32 = arith.constant 0 : i32
    %c0_i32_0 = arith.constant 0 : i32
    %c0_i32_1 = arith.constant 0 : i32
    return %c0_i32, %c0_i32_0 : i32, i32
  }
  func.func @transform_12(%arg0: i32) -> (i32, i32) {
    %c0_i32 = arith.constant 0 : i32
    %c0_i32_0 = arith.constant 0 : i32
    %c0_i32_1 = arith.constant 0 : i32
    return %c0_i32, %c0_i32_0 : i32, i32
  }
  func.func @transform_13(%arg0: i32) -> (i32, i32) {
    %c0_i32 = arith.constant 0 : i32
    %c0_i32_0 = arith.constant 0 : i32
    %c0_i32_1 = arith.constant 0 : i32
    return %c0_i32, %c0_i32_0 : i32, i32
  }
  func.func @transform_14(%arg0: i32) -> (i32, i32) {
    %c0_i32 = arith.constant 0 : i32
    %c0_i32_0 = arith.constant 0 : i32
    return %arg0, %c0_i32 : i32, i32
  }
  func.func @transform_15(%arg0: i32) -> (i32, i32) {
    %c0_i32 = arith.constant 0 : i32
    %c0_i32_0 = arith.constant 0 : i32
    return %arg0, %c0_i32 : i32, i32
  }
}

</mosaic_0001>

<llo_original>
// kernel: tpu_custom_call.1
$region0: #{tpu_custom_call.1}
  #allocation0 [shape = 'u32[]', space=smem, size = 0x4, offset = 0x4, fixed_abs, tag = 'smem constant byte address 0x4 - core index']
  #allocation1 [shape = 'u32[144,128]{1,0:T(1,128)}', space=vmem, size = 0x12000, scoped, tag = 'internal scratch']
  %s0 = inlined_call_operand.vmem [shape: f32[2,16,32], index: 0, kind: input, shape index: {}]
  %s1 = inlined_call_operand.vmem [shape: f32[8,32], index: 1, kind: input, shape index: {}]
  %s2 = inlined_call_operand.vmem [shape: f32[32,96], index: 2, kind: input, shape index: {}]
  %s3 = inlined_call_operand.vmem [shape: f32[1,96], index: 3, kind: input, shape index: {}]
  %s4 = inlined_call_operand.vmem [shape: f32[32,32], index: 4, kind: input, shape index: {}]
  %s5 = inlined_call_operand.vmem [shape: f32[1,32], index: 5, kind: input, shape index: {}]
  %s6 = inlined_call_operand.vmem [shape: f32[1,32], index: 6, kind: input, shape index: {}]
  %s7 = inlined_call_operand.vmem [shape: f32[1,32], index: 7, kind: input, shape index: {}]
  %s8 = inlined_call_operand.vmem [shape: f32[32,128], index: 8, kind: input, shape index: {}]
  %s9 = inlined_call_operand.vmem [shape: f32[1,128], index: 9, kind: input, shape index: {}]
  %s10 = inlined_call_operand.vmem [shape: f32[128,32], index: 10, kind: input, shape index: {}]
  %s11 = inlined_call_operand.vmem [shape: f32[1,32], index: 11, kind: input, shape index: {}]
  %s12 = inlined_call_operand.vmem [shape: f32[1,32], index: 12, kind: input, shape index: {}]
  %s13 = inlined_call_operand.vmem [shape: f32[1,32], index: 13, kind: input, shape index: {}]
  %s14 = inlined_call_operand.hbm [shape: f32[32,32], index: 14, kind: output, shape index: {0}]
  %s15 = inlined_call_operand.vmem [shape: f32[32,16], index: 15, kind: output, shape index: {1}]
  %16 = xla_tuple %s14, %s15
  %s17 = sld [smem:[#allocation0]]
  $region74: #{tpu_custom_call.1} parent=0
    _
  %s19 = ssub.s32 1, %s17
  %s20 = scalar_select 0, %s19, %s17
  $region1: #{tpu_custom_call.1} parent=0
    #allocation2 [shape = 'u8[16384]{0}', space=vmem, size = 0x4000, scoped, tag = 'output window, operand 0, single buffered']
    #allocation3 [shape = 's32[1]{0}', space=sflag, size = 0x4, scoped, tag = 'scoped memory for tpu_custom_call.1']
    %21 = vsyncpa [#allocation3], 0
    // Predicated region
    $region2: #{tpu_custom_call.1} parent=1 // pred_check
      _
    $region3: #{tpu_custom_call.1} parent=1 // pred_check_branch
      %23 = sbr.rel (0) target = $region5
    $region4: #{tpu_custom_call.1} parent=1 // pred_region
      _
    $region5: #{tpu_custom_call.1} parent=1 // pred_fallthru
      _
    // Predicated region
    $region6: #{tpu_custom_call.1} parent=1 // pred_check
      _
    $region7: #{tpu_custom_call.1} parent=1 // pred_check_branch
      %25 = sbr.rel (0) target = $region9
    $region8: #{tpu_custom_call.1} parent=1 // pred_region
      _
    $region9: #{tpu_custom_call.1} parent=1 // pred_fallthru
      _
    // Predicated region
    $region10: #{tpu_custom_call.1} parent=1 // pred_check
      _
    $region11: #{tpu_custom_call.1} parent=1 // pred_check_branch
      %27 = sbr.rel (0) target = $region13
    $region12: #{tpu_custom_call.1} parent=1 // pred_region
      _
    $region13: #{tpu_custom_call.1} parent=1 // pred_fallthru
      _
    // Predicated region
    $region14: #{tpu_custom_call.1} parent=1 // pred_check
      _
    $region15: #{tpu_custom_call.1} parent=1 // pred_check_branch
      %29 = sbr.rel (0) target = $region17
    $region16: #{tpu_custom_call.1} parent=1 // pred_region
      _
    $region17: #{tpu_custom_call.1} parent=1 // pred_fallthru
      _
    // Predicated region
    $region18: #{tpu_custom_call.1} parent=1 // pred_check
      _
    $region19: #{tpu_custom_call.1} parent=1 // pred_check_branch
      %31 = sbr.rel (0) target = $region21
    $region20: #{tpu_custom_call.1} parent=1 // pred_region
      _
    $region21: #{tpu_custom_call.1} parent=1 // pred_fallthru
      _
    // Predicated region
    $region22: #{tpu_custom_call.1} parent=1 // pred_check
      _
    $region23: #{tpu_custom_call.1} parent=1 // pred_check_branch
      %33 = sbr.rel (0) target = $region25
    $region24: #{tpu_custom_call.1} parent=1 // pred_region
      _
    $region25: #{tpu_custom_call.1} parent=1 // pred_fallthru
      _
    // Predicated region
    $region26: #{tpu_custom_call.1} parent=1 // pred_check
      _
    $region27: #{tpu_custom_call.1} parent=1 // pred_check_branch
      %35 = sbr.rel (0) target = $region29
    $region28: #{tpu_custom_call.1} parent=1 // pred_region
      _
    $region29: #{tpu_custom_call.1} parent=1 // pred_fallthru
      _
    // Predicated region
    $region30: #{tpu_custom_call.1} parent=1 // pred_check
      _
    $region31: #{tpu_custom_call.1} parent=1 // pred_check_branch
      %37 = sbr.rel (0) target = $region33
    $region32: #{tpu_custom_call.1} parent=1 // pred_region
      _
    $region33: #{tpu_custom_call.1} parent=1 // pred_fallthru
      _
    // Predicated region
    $region34: #{tpu_custom_call.1} parent=1 // pred_check
      _
    $region35: #{tpu_custom_call.1} parent=1 // pred_check_branch
      %39 = sbr.rel (0) target = $region37
    $region36: #{tpu_custom_call.1} parent=1 // pred_region
      _
    $region37: #{tpu_custom_call.1} parent=1 // pred_fallthru
      _
    // Predicated region
    $region38: #{tpu_custom_call.1} parent=1 // pred_check
      _
    $region39: #{tpu_custom_call.1} parent=1 // pred_check_branch
      %41 = sbr.rel (0) target = $region41
    $region40: #{tpu_custom_call.1} parent=1 // pred_region
      _
    $region41: #{tpu_custom_call.1} parent=1 // pred_fallthru
      _
    // Predicated region
    $region42: #{tpu_custom_call.1} parent=1 // pred_check
      _
    $region43: #{tpu_custom_call.1} parent=1 // pred_check_branch
      %43 = sbr.rel (0) target = $region45
    $region44: #{tpu_custom_call.1} parent=1 // pred_region
      _
    $region45: #{tpu_custom_call.1} parent=1 // pred_fallthru
      _
    // Predicated region
    $region46: #{tpu_custom_call.1} parent=1 // pred_check
      _
    $region47: #{tpu_custom_call.1} parent=1 // pred_check_branch
      %45 = sbr.rel (0) target = $region49
    $region48: #{tpu_custom_call.1} parent=1 // pred_region
      _
    $region49: #{tpu_custom_call.1} parent=1 // pred_fallthru
      _
    // Predicated region
    $region50: #{tpu_custom_call.1} parent=1 // pred_check
      _
    $region51: #{tpu_custom_call.1} parent=1 // pred_check_branch
      %47 = sbr.rel (0) target = $region53
    $region52: #{tpu_custom_call.1} parent=1 // pred_region
      _
    $region53: #{tpu_custom_call.1} parent=1 // pred_fallthru
      _
    // Predicated region
    $region54: #{tpu_custom_call.1} parent=1 // pred_check
      _
    $region55: #{tpu_custom_call.1} parent=1 // pred_check_branch
      %49 = sbr.rel (0) target = $region57
    $region56: #{tpu_custom_call.1} parent=1 // pred_region
      _
    $region57: #{tpu_custom_call.1} parent=1 // pred_fallthru
      _
    %v50 = vld [vmem:[%s0] sm:$0xff]
    %v51 = vld [vmem:[%s0 + $0x8] sm:$0xff]
    %v52 = vld [vmem:[%s0 + $0x10] sm:$0xff]
    %v53 = vld [vmem:[%s0 + $0x18] sm:$0xff]
    %v54 = vld [vmem:[%s1] sm:$0xff]
    %v55 = vld [vmem:[%s2] sm:$0xff]
    %v56 = vld [vmem:[%s2 + $0x8] sm:$0xff]
    %v57 = vld [vmem:[%s2 + $0x10] sm:$0xff]
    %v58 = vld [vmem:[%s2 + $0x18] sm:$0xff]
    %v59 = vld [vmem:[%s3] sm:$0x1]
    %v61 = vlaneseq
    %v62 = vshrl.u32 %v61, 7
    %v63 = vsub.s32 0, %v62
    %v64 = vrot.slane %v59, %v63
    %vm66 = vcmask 261120
    %v68 = vsel %vm66, %v50, 0
    %v71 = vsel %vm66, %v51, 0
    %v74 = vsel %vm66, %v52, 0
    %v77 = vsel %vm66, %v53, 0
    %79 = vmatprep.subr.mxu0 0.0
    %80 = vmatpush1.msra.mxu0 %v55
    %81 = vmatprep.subr.mxu0 0.0
    %82 = vmatpush1.msra.mxu0 %v56
    %83 = vmatprep.subr.mxu0 0.0
    %84 = vmatpush1.msra.mxu0 %v57
    %85 = vmatprep.subr.mxu0 0.0
    %86 = vmatpush1.msra.mxu0 %v58
    %87 = vmatprep.subr.mxu0 0.0
    %88 = vmatpush1.msra.mxu0 0.0
    %89 = vmatprep.subr.mxu0 0.0
    %90 = vmatpush1.msra.mxu0 0.0
    %91 = vmatprep.subr.mxu0 0.0
    %92 = vmatpush1.msra.mxu0 0.0
    %93 = vmatprep.subr.mxu0 0.0
    %94 = vmatpush1.msra.mxu0 0.0
    %95 = vmatprep.subr.mxu0 0.0
    %96 = vmatpush1.msra.mxu0 0.0
    %97 = vmatprep.subr.mxu0 0.0
    %98 = vmatpush1.msra.mxu0 0.0
    %99 = vmatprep.subr.mxu0 0.0
    %100 = vmatpush1.msra.mxu0 0.0
    %101 = vmatprep.subr.mxu0 0.0
    %102 = vmatpush1.msra.mxu0 0.0
    %103 = vmatprep.subr.mxu0 0.0
    %104 = vmatpush1.msra.mxu0 0.0
    %105 = vmatprep.subr.mxu0 0.0
    %106 = vmatpush1.msra.mxu0 0.0
    %107 = vmatprep.subr.mxu0 0.0
    %108 = vmatpush1.msra.mxu0 0.0
    %109 = vmatprep.subr.mxu0 0.0
    %110 = vmatpush1.msra.mxu0 0.0
    %111 = vmatprep.subr.mxu0 0.0
    %112 = vmatpush1.msra.mxu0 0.0
    %113 = vmatprep.subr.mxu0 0.0
    %114 = vmatpush1.msra.mxu0 0.0
    %115 = vmatprep.subr.mxu0 0.0
    %116 = vmatpush1.msra.mxu0 0.0
    %117 = vmatprep.subr.mxu0 0.0
    %118 = vmatpush1.msra.mxu0 0.0
    %119 = vmatprep.subr.mxu0 0.0
    %120 = vmatpush1.msra.mxu0 0.0
    %121 = vmatprep.subr.mxu0 0.0
    %122 = vmatpush1.msra.mxu0 0.0
    %123 = vmatprep.subr.mxu0 0.0
    %124 = vmatpush1.msra.mxu0 0.0
    %125 = vmatprep.subr.mxu0 0.0
    %126 = vmatpush1.msra.mxu0 0.0
    %127 = vmatprep.subr.mxu0 0.0
    %128 = vmatpush1.msra.mxu0 0.0
    %129 = vmatprep.subr.mxu0 0.0
    %130 = vmatpush1.msra.mxu0 0.0
    %131 = vmatprep.subr.mxu0 0.0
    %132 = vmatpush1.msra.mxu0 0.0
    %133 = vmatprep.subr.mxu0 0.0
    %134 = vmatpush1.msra.mxu0 0.0
    %135 = vmatprep.subr.mxu0 0.0
    %136 = vmatpush1.msra.mxu0 0.0
    %137 = vmatprep.subr.mxu0 0.0
    %138 = vmatpush1.msra.mxu0 0.0
    %139 = vmatprep.subr.mxu0 0.0
    %140 = vmatpush1.msra.mxu0 0.0
    %141 = vmatprep.subr.mxu0 0.0
    %142 = vmatpush1.msra.mxu0 0.0
    %143 = vmatprep.mubr.f32.mxu0 0.0
    %144 = vmatmul.mubr.f32.gmra.mrb[0].mxu0 %v68
    %v145 = vpop.f32.mrb[0].mxu0
    %v146 = vadd.f32 %v64, %v145
    %v147 = vpop.f32.mrb[0].mxu0
    %148 = vmatprep.mubr.f32.mxu0 0.0
    %149 = vmatmul.mubr.f32.gmra.mrb[0].mxu0 %v71
    %v150 = vpop.f32.mrb[0].mxu0
    %v151 = vadd.f32 %v64, %v150
    %v152 = vpop.f32.mrb[0].mxu0
    %153 = vmatprep.mubr.f32.mxu0 0.0
    %154 = vmatmul.mubr.f32.gmra.mrb[0].mxu0 %v74
    %v155 = vpop.f32.mrb[0].mxu0
    %v156 = vadd.f32 %v64, %v155
    %v157 = vpop.f32.mrb[0].mxu0
    %158 = vmatprep.mubr.f32.mxu0 0.0
    %159 = vmatmul.mubr.f32.gmra.mrb[0].mxu0 %v77
    %v160 = vpop.f32.mrb[0].mxu0
    %v161 = vadd.f32 %v64, %v160
    %v162 = vpop.f32.mrb[0].mxu0
    %163 = vdwg.mxu0
    %v165 = vcombine.high %v54, %v54
    %v167 = vunpack.c.l.s4 1966171168
    %v168 = vunpack.c.0.s8 %v167
    %v169 = vlaneseq
    %v170 = vshrl.u32 %v169, 7
    %v171 = vsub.s32 %v168, %v170
    %v172 = vrot.slane %v54, %v171
    %v174 = vunpack.c.l.s4 1966171168
    %v175 = vunpack.c.0.s8 %v174
    %v176 = vlaneseq
    %v177 = vshrl.u32 %v176, 7
    %v178 = vsub.s32 %v175, %v177
    %v179 = vrot.slane %v165, %v178
    %v180 = vcombine.high %v172, %v172
    %v181 = vcombine.high %v179, %v179
    %v183 = vunpack.c.l.s4 1966171168
    %v184 = vunpack.c.0.s8 %v183
    %v185 = vlaneseq
    %v186 = vshrl.u32 %v185, 7
    %v187 = vsub.s32 %v184, %v186
    %v188 = vrot.slane %v172, %v187
    %v190 = vunpack.c.l.s4 1966171168
    %v191 = vunpack.c.0.s8 %v190
    %v192 = vlaneseq
    %v193 = vshrl.u32 %v192, 7
    %v194 = vsub.s32 %v191, %v193
    %v195 = vrot.slane %v179, %v194
    %v197 = vunpack.c.l.s4 1966171168
    %v198 = vunpack.c.0.s8 %v197
    %v199 = vlaneseq
    %v200 = vshrl.u32 %v199, 7
    %v201 = vsub.s32 %v198, %v200
    %v202 = vrot.slane %v180, %v201
    %v204 = vunpack.c.l.s4 1966171168
    %v205 = vunpack.c.0.s8 %v204
    %v206 = vlaneseq
    %v207 = vshrl.u32 %v206, 7
    %v208 = vsub.s32 %v205, %v207
    %v209 = vrot.slane %v181, %v208
    %v210 = vcombine.high %v188, %v188
    %v211 = vcombine.high %v195, %v195
    %v212 = vcombine.high %v202, %v202
    %v213 = vcombine.high %v209, %v209
    %v214 = vlaneseq
    %v215 = vshrl.u32 %v214, 7
    %v216 = vsub.s32 0, %v215
    %v217 = vrot.slane %v188, %v216
    %v218 = vlaneseq
    %v219 = vshrl.u32 %v218, 7
    %v220 = vsub.s32 0, %v219
    %v221 = vrot.slane %v202, %v220
    %v222 = vlaneseq
    %v223 = vshrl.u32 %v222, 7
    %v224 = vsub.s32 0, %v223
    %v225 = vrot.slane %v210, %v224
    %v226 = vlaneseq
    %v227 = vshrl.u32 %v226, 7
    %v228 = vsub.s32 0, %v227
    %v229 = vrot.slane %v212, %v228
    %v230 = vlaneseq
    %v231 = vshrl.u32 %v230, 7
    %v232 = vsub.s32 0, %v231
    %v233 = vrot.slane %v195, %v232
    %v234 = vlaneseq
    %v235 = vshrl.u32 %v234, 7
    %v236 = vsub.s32 0, %v235
    %v237 = vrot.slane %v209, %v236
    %v238 = vlaneseq
    %v239 = vshrl.u32 %v238, 7
    %v240 = vsub.s32 0, %v239
    %v241 = vrot.slane %v211, %v240
    %v242 = vlaneseq
    %v243 = vshrl.u32 %v242, 7
    %v244 = vsub.s32 0, %v243
    %v245 = vrot.slane %v213, %v244
    %v254 = vmul.f32 %v146, %v217
    %v255 = vmul.f32 %v151, %v217
    %v256 = vmul.f32 %v146, %v221
    %v257 = vmul.f32 %v151, %v221
    %v258 = vmul.f32 %v146, %v225
    %v259 = vmul.f32 %v151, %v225
    %v260 = vmul.f32 %v146, %v229
    %v261 = vmul.f32 %v151, %v229
    %v262 = vmul.f32 %v146, %v233
    %v263 = vmul.f32 %v151, %v233
    %v264 = vmul.f32 %v146, %v237
    %v265 = vmul.f32 %v151, %v237
    %v266 = vmul.f32 %v146, %v241
    %v267 = vmul.f32 %v151, %v241
    %v268 = vmul.f32 %v146, %v245
    %v269 = vmul.f32 %v151, %v245
    %v270 = vmul.f32 %v156, %v217
    %v271 = vmul.f32 %v161, %v217
    %v272 = vmul.f32 %v156, %v221
    %v273 = vmul.f32 %v161, %v221
    %v274 = vmul.f32 %v156, %v225
    %v275 = vmul.f32 %v161, %v225
    %v276 = vmul.f32 %v156, %v229
    %v277 = vmul.f32 %v161, %v229
    %v278 = vmul.f32 %v156, %v233
    %v279 = vmul.f32 %v161, %v233
    %v280 = vmul.f32 %v156, %v237
    %v281 = vmul.f32 %v161, %v237
    %v282 = vmul.f32 %v156, %v241
    %v283 = vmul.f32 %v161, %v241
    %v284 = vmul.f32 %v156, %v245
    %v285 = vmul.f32 %v161, %v245
    %288 = vrot.lane.b32.xlu0 %v146, 96
    %v289 = vpop.permute.xlu0 %288
    %290 = vrot.lane.b32.xlu0 %v151, 96
    %v291 = vpop.permute.xlu0 %290
    %v293 = vsel %vm66, %v254, 0
    %v296 = vsel %vm66, %v255, 0
    %v299 = vsel %vm66, %v256, 0
    %v302 = vsel %vm66, %v257, 0
    %v305 = vsel %vm66, %v258, 0
    %v308 = vsel %vm66, %v259, 0
    %v311 = vsel %vm66, %v260, 0
    %v314 = vsel %vm66, %v261, 0
    %v317 = vsel %vm66, %v262, 0
    %v320 = vsel %vm66, %v263, 0
    %v323 = vsel %vm66, %v264, 0
    %v326 = vsel %vm66, %v265, 0
    %v329 = vsel %vm66, %v266, 0
    %v332 = vsel %vm66, %v267, 0
    %v335 = vsel %vm66, %v268, 0
    %v338 = vsel %vm66, %v269, 0
    %v340 = vsel %vm66, %v289, 0
    %v342 = vsel %vm66, %v291, 0
    %344 = vmatprep.subr.mxu0 0.0
    %345 = vmatpush1.xpose.msra.mxu0 %v340
    %346 = vmatprep.subr.mxu0 0.0
    %347 = vmatpush1.xpose.msra.mxu0 %v342
    %348 = vmatprep.subr.mxu0 0.0
    %349 = vmatpush1.xpose.msra.mxu0 0.0
    %350 = vmatprep.subr.mxu0 0.0
    %351 = vmatpush1.xpose.msra.mxu0 0.0
    %352 = vmatprep.subr.mxu0 0.0
    %353 = vmatpush1.xpose.msra.mxu0 0.0
    %354 = vmatprep.subr.mxu0 0.0
    %355 = vmatpush1.xpose.msra.mxu0 0.0
    %356 = vmatprep.subr.mxu0 0.0
    %357 = vmatpush1.xpose.msra.mxu0 0.0
    %358 = vmatprep.subr.mxu0 0.0
    %359 = vmatpush1.xpose.msra.mxu0 0.0
    %360 = vmatprep.subr.mxu0 0.0
    %361 = vmatpush1.xpose.msra.mxu0 0.0
    %362 = vmatprep.subr.mxu0 0.0
    %363 = vmatpush1.xpose.msra.mxu0 0.0
    %364 = vmatprep.subr.mxu0 0.0
    %365 = vmatpush1.xpose.msra.mxu0 0.0
    %366 = vmatprep.subr.mxu0 0.0
    %367 = vmatpush1.xpose.msra.mxu0 0.0
    %368 = vmatprep.subr.mxu0 0.0
    %369 = vmatpush1.xpose.msra.mxu0 0.0
    %370 = vmatprep.subr.mxu0 0.0
    %371 = vmatpush1.xpose.msra.mxu0 0.0
    %372 = vmatprep.subr.mxu0 0.0
    %373 = vmatpush1.xpose.msra.mxu0 0.0
    %374 = vmatprep.subr.mxu0 0.0
    %375 = vmatpush1.xpose.msra.mxu0 0.0
    %376 = vmatprep.subr.mxu0 0.0
    %377 = vmatpush1.xpose.msra.mxu0 0.0
    %378 = vmatprep.subr.mxu0 0.0
    %379 = vmatpush1.xpose.msra.mxu0 0.0
    %380 = vmatprep.subr.mxu0 0.0
    %381 = vmatpush1.xpose.msra.mxu0 0.0
    %382 = vmatprep.subr.mxu0 0.0
    %383 = vmatpush1.xpose.msra.mxu0 0.0
    %384 = vmatprep.subr.mxu0 0.0
    %385 = vmatpush1.xpose.msra.mxu0 0.0
    %386 = vmatprep.subr.mxu0 0.0
    %387 = vmatpush1.xpose.msra.mxu0 0.0
    %388 = vmatprep.subr.mxu0 0.0
    %389 = vmatpush1.xpose.msra.mxu0 0.0
    %390 = vmatprep.subr.mxu0 0.0
    %391 = vmatpush1.xpose.msra.mxu0 0.0
    %392 = vmatprep.subr.mxu0 0.0
    %393 = vmatpush1.xpose.msra.mxu0 0.0
    %394 = vmatprep.subr.mxu0 0.0
    %395 = vmatpush1.xpose.msra.mxu0 0.0
    %396 = vmatprep.subr.mxu0 0.0
    %397 = vmatpush1.xpose.msra.mxu0 0.0
    %398 = vmatprep.subr.mxu0 0.0
    %399 = vmatpush1.xpose.msra.mxu0 0.0
    %400 = vmatprep.subr.mxu0 0.0
    %401 = vmatpush1.xpose.msra.mxu0 0.0
    %402 = vmatprep.subr.mxu0 0.0
    %403 = vmatpush1.xpose.msra.mxu0 0.0
    %404 = vmatprep.subr.mxu0 0.0
    %405 = vmatpush1.xpose.msra.mxu0 0.0
    %406 = vmatprep.subr.mxu0 0.0
    %407 = vmatpush1.xpose.msra.mxu0 0.0
    %408 = vmatprep.mubr.f32.mxu0 0.0
    %409 = vmatmul.mubr.f32.gmra.mrb[0].mxu0 %v293
    %v410 = vpop.f32.mrb[0].mxu0
    %v411 = vadd.f32 0.0, %v410
    %v412 = vpop.f32.mrb[0].mxu0
    %413 = vmatprep.mubr.f32.mxu0 0.0
    %414 = vmatmul.mubr.f32.gmra.mrb[0].mxu0 %v296
    %v415 = vpop.f32.mrb[0].mxu0
    %v416 = vadd.f32 0.0, %v415
    %v417 = vpop.f32.mrb[0].mxu0
    %418 = vmatprep.mubr.f32.mxu0 0.0
    %419 = vmatmul.mubr.f32.gmra.mrb[0].mxu0 %v299
    %v420 = vpop.f32.mrb[0].mxu0
    %v421 = vadd.f32 0.0, %v420
    %v422 = vpop.f32.mrb[0].mxu0
    %423 = vmatprep.mubr.f32.mxu0 0.0
    %424 = vmatmul.mubr.f32.gmra.mrb[0].mxu0 %v302
    %v425 = vpop.f32.mrb[0].mxu0
    %v426 = vadd.f32 0.0, %v425
    %v427 = vpop.f32.mrb[0].mxu0
    %428 = vmatprep.mubr.f32.mxu0 0.0
    %429 = vmatmul.mubr.f32.gmra.mrb[0].mxu0 %v305
    %v430 = vpop.f32.mrb[0].mxu0
    %v431 = vadd.f32 0.0, %v430
    %v432 = vpop.f32.mrb[0].mxu0
    %433 = vmatprep.mubr.f32.mxu0 0.0
    %434 = vmatmul.mubr.f32.gmra.mrb[0].mxu0 %v308
    %v435 = vpop.f32.mrb[0].mxu0
    %v436 = vadd.f32 0.0, %v435
    %v437 = vpop.f32.mrb[0].mxu0
    %438 = vmatprep.mubr.f32.mxu0 0.0
    %439 = vmatmul.mubr.f32.gmra.mrb[0].mxu0 %v311
    %v440 = vpop.f32.mrb[0].mxu0
    %v441 = vadd.f32 0.0, %v440
    %v442 = vpop.f32.mrb[0].mxu0
    %443 = vmatprep.mubr.f32.mxu0 0.0
    %444 = vmatmul.mubr.f32.gmra.mrb[0].mxu0 %v314
    %v445 = vpop.f32.mrb[0].mxu0
    %v446 = vadd.f32 0.0, %v445
    %v447 = vpop.f32.mrb[0].mxu0
    %448 = vmatprep.mubr.f32.mxu0 0.0
    %449 = vmatmul.mubr.f32.gmra.mrb[0].mxu0 %v317
    %v450 = vpop.f32.mrb[0].mxu0
    %v451 = vadd.f32 0.0, %v450
    %v452 = vpop.f32.mrb[0].mxu0
    %453 = vmatprep.mubr.f32.mxu0 0.0
    %454 = vmatmul.mubr.f32.gmra.mrb[0].mxu0 %v320
    %v455 = vpop.f32.mrb[0].mxu0
    %v456 = vadd.f32 0.0, %v455
    %v457 = vpop.f32.mrb[0].mxu0
    %458 = vmatprep.mubr.f32.mxu0 0.0
    %459 = vmatmul.mubr.f32.gmra.mrb[0].mxu0 %v323
    %v460 = vpop.f32.mrb[0].mxu0
    %v461 = vadd.f32 0.0, %v460
    %v462 = vpop.f32.mrb[0].mxu0
    %463 = vmatprep.mubr.f32.mxu0 0.0
    %464 = vmatmul.mubr.f32.gmra.mrb[0].mxu0 %v326
    %v465 = vpop.f32.mrb[0].mxu0
    %v466 = vadd.f32 0.0, %v465
    %v467 = vpop.f32.mrb[0].mxu0
    %468 = vmatprep.mubr.f32.mxu0 0.0
    %469 = vmatmul.mubr.f32.gmra.mrb[0].mxu0 %v329
    %v470 = vpop.f32.mrb[0].mxu0
    %v471 = vadd.f32 0.0, %v470
    %v472 = vpop.f32.mrb[0].mxu0
    %473 = vmatprep.mubr.f32.mxu0 0.0
    %474 = vmatmul.mubr.f32.gmra.mrb[0].mxu0 %v332
    %v475 = vpop.f32.mrb[0].mxu0
    %v476 = vadd.f32 0.0, %v475
    %v477 = vpop.f32.mrb[0].mxu0
    %478 = vmatprep.mubr.f32.mxu0 0.0
    %479 = vmatmul.mubr.f32.gmra.mrb[0].mxu0 %v335
    %v480 = vpop.f32.mrb[0].mxu0
    %v481 = vadd.f32 0.0, %v480
    %v482 = vpop.f32.mrb[0].mxu0
    %483 = vmatprep.mubr.f32.mxu0 0.0
    %484 = vmatmul.mubr.f32.gmra.mrb[0].mxu0 %v338
    %v485 = vpop.f32.mrb[0].mxu0
    %v486 = vadd.f32 0.0, %v485
    %v487 = vpop.f32.mrb[0].mxu0
    %488 = vdwg.mxu0
    %491 = vrot.lane.b32.xlu0 %v156, 96
    %v492 = vpop.permute.xlu0 %491
    %493 = vrot.lane.b32.xlu0 %v161, 96
    %v494 = vpop.permute.xlu0 %493
    %v496 = vsel %vm66, %v270, 0
    %v499 = vsel %vm66, %v271, 0
    %v502 = vsel %vm66, %v272, 0
    %v505 = vsel %vm66, %v273, 0
    %v508 = vsel %vm66, %v274, 0
    %v511 = vsel %vm66, %v275, 0
    %v514 = vsel %vm66, %v276, 0
    %v517 = vsel %vm66, %v277, 0
    %v520 = vsel %vm66, %v278, 0
    %v523 = vsel %vm66, %v279, 0
    %v526 = vsel %vm66, %v280, 0
    %v529 = vsel %vm66, %v281, 0
    %v532 = vsel %vm66, %v282, 0
    %v535 = vsel %vm66, %v283, 0
    %v538 = vsel %vm66, %v284, 0
    %v541 = vsel %vm66, %v285, 0
    %v543 = vsel %vm66, %v492, 0
    %v545 = vsel %vm66, %v494, 0
    %547 = vmatprep.subr.mxu0 0.0
    %548 = vmatpush1.xpose.msra.mxu0 %v543
    %549 = vmatprep.subr.mxu0 0.0
    %550 = vmatpush1.xpose.msra.mxu0 %v545
    %551 = vmatprep.subr.mxu0 0.0
    %552 = vmatpush1.xpose.msra.mxu0 0.0
    %553 = vmatprep.subr.mxu0 0.0
    %554 = vmatpush1.xpose.msra.mxu0 0.0
    %555 = vmatprep.subr.mxu0 0.0
    %556 = vmatpush1.xpose.msra.mxu0 0.0
    %557 = vmatprep.subr.mxu0 0.0
    %558 = vmatpush1.xpose.msra.mxu0 0.0
    %559 = vmatprep.subr.mxu0 0.0
    %560 = vmatpush1.xpose.msra.mxu0 0.0
    %561 = vmatprep.subr.mxu0 0.0
    %562 = vmatpush1.xpose.msra.mxu0 0.0
    %563 = vmatprep.subr.mxu0 0.0
    %564 = vmatpush1.xpose.msra.mxu0 0.0
    %565 = vmatprep.subr.mxu0 0.0
    %566 = vmatpush1.xpose.msra.mxu0 0.0
    %567 = vmatprep.subr.mxu0 0.0
    %568 = vmatpush1.xpose.msra.mxu0 0.0
    %569 = vmatprep.subr.mxu0 0.0
    %570 = vmatpush1.xpose.msra.mxu0 0.0
    %571 = vmatprep.subr.mxu0 0.0
    %572 = vmatpush1.xpose.msra.mxu0 0.0
    %573 = vmatprep.subr.mxu0 0.0
    %574 = vmatpush1.xpose.msra.mxu0 0.0
    %575 = vmatprep.subr.mxu0 0.0
    %576 = vmatpush1.xpose.msra.mxu0 0.0
    %577 = vmatprep.subr.mxu0 0.0
    %578 = vmatpush1.xpose.msra.mxu0 0.0
    %579 = vmatprep.subr.mxu0 0.0
    %580 = vmatpush1.xpose.msra.mxu0 0.0
    %581 = vmatprep.subr.mxu0 0.0
    %582 = vmatpush1.xpose.msra.mxu0 0.0
    %583 = vmatprep.subr.mxu0 0.0
    %584 = vmatpush1.xpose.msra.mxu0 0.0
    %585 = vmatprep.subr.mxu0 0.0
    %586 = vmatpush1.xpose.msra.mxu0 0.0
    %587 = vmatprep.subr.mxu0 0.0
    %588 = vmatpush1.xpose.msra.mxu0 0.0
    %589 = vmatprep.subr.mxu0 0.0
    %590 = vmatpush1.xpose.msra.mxu0 0.0
    %591 = vmatprep.subr.mxu0 0.0
    %592 = vmatpush1.xpose.msra.mxu0 0.0
    %593 = vmatprep.subr.mxu0 0.0
    %594 = vmatpush1.xpose.msra.mxu0 0.0
    %595 = vmatprep.subr.mxu0 0.0
    %596 = vmatpush1.xpose.msra.mxu0 0.0
    %597 = vmatprep.subr.mxu0 0.0
    %598 = vmatpush1.xpose.msra.mxu0 0.0
    %599 = vmatprep.subr.mxu0 0.0
    %600 = vmatpush1.xpose.msra.mxu0 0.0
    %601 = vmatprep.subr.mxu0 0.0
    %602 = vmatpush1.xpose.msra.mxu0 0.0
    %603 = vmatprep.subr.mxu0 0.0
    %604 = vmatpush1.xpose.msra.mxu0 0.0
    %605 = vmatprep.subr.mxu0 0.0
    %606 = vmatpush1.xpose.msra.mxu0 0.0
    %607 = vmatprep.subr.mxu0 0.0
    %608 = vmatpush1.xpose.msra.mxu0 0.0
    %609 = vmatprep.subr.mxu0 0.0
    %610 = vmatpush1.xpose.msra.mxu0 0.0
    %611 = vmatprep.mubr.f32.mxu0 0.0
    %612 = vmatmul.mubr.f32.gmra.mrb[0].mxu0 %v496
    %v613 = vpop.f32.mrb[0].mxu0
    %v614 = vadd.f32 0.0, %v613
    %v615 = vpop.f32.mrb[0].mxu0
    %616 = vmatprep.mubr.f32.mxu0 0.0
    %617 = vmatmul.mubr.f32.gmra.mrb[0].mxu0 %v499
    %v618 = vpop.f32.mrb[0].mxu0
    %v619 = vadd.f32 0.0, %v618
    %v620 = vpop.f32.mrb[0].mxu0
    %621 = vmatprep.mubr.f32.mxu0 0.0
    %622 = vmatmul.mubr.f32.gmra.mrb[0].mxu0 %v502
    %v623 = vpop.f32.mrb[0].mxu0
    %v624 = vadd.f32 0.0, %v623
    %v625 = vpop.f32.mrb[0].mxu0
    %626 = vmatprep.mubr.f32.mxu0 0.0
    %627 = vmatmul.mubr.f32.gmra.mrb[0].mxu0 %v505
    %v628 = vpop.f32.mrb[0].mxu0
    %v629 = vadd.f32 0.0, %v628
    %v630 = vpop.f32.mrb[0].mxu0
    %631 = vmatprep.mubr.f32.mxu0 0.0
    %632 = vmatmul.mubr.f32.gmra.mrb[0].mxu0 %v508
    %v633 = vpop.f32.mrb[0].mxu0
    %v634 = vadd.f32 0.0, %v633
    %v635 = vpop.f32.mrb[0].mxu0
    %636 = vmatprep.mubr.f32.mxu0 0.0
    %637 = vmatmul.mubr.f32.gmra.mrb[0].mxu0 %v511
    %v638 = vpop.f32.mrb[0].mxu0
    %v639 = vadd.f32 0.0, %v638
    %v640 = vpop.f32.mrb[0].mxu0
    %641 = vmatprep.mubr.f32.mxu0 0.0
    %642 = vmatmul.mubr.f32.gmra.mrb[0].mxu0 %v514
    %v643 = vpop.f32.mrb[0].mxu0
    %v644 = vadd.f32 0.0, %v643
    %v645 = vpop.f32.mrb[0].mxu0
    %646 = vmatprep.mubr.f32.mxu0 0.0
    %647 = vmatmul.mubr.f32.gmra.mrb[0].mxu0 %v517
    %v648 = vpop.f32.mrb[0].mxu0
    %v649 = vadd.f32 0.0, %v648
    %v650 = vpop.f32.mrb[0].mxu0
    %651 = vmatprep.mubr.f32.mxu0 0.0
    %652 = vmatmul.mubr.f32.gmra.mrb[0].mxu0 %v520
    %v653 = vpop.f32.mrb[0].mxu0
    %v654 = vadd.f32 0.0, %v653
    %v655 = vpop.f32.mrb[0].mxu0
    %656 = vmatprep.mubr.f32.mxu0 0.0
    %657 = vmatmul.mubr.f32.gmra.mrb[0].mxu0 %v523
    %v658 = vpop.f32.mrb[0].mxu0
    %v659 = vadd.f32 0.0, %v658
    %v660 = vpop.f32.mrb[0].mxu0
    %661 = vmatprep.mubr.f32.mxu0 0.0
    %662 = vmatmul.mubr.f32.gmra.mrb[0].mxu0 %v526
    %v663 = vpop.f32.mrb[0].mxu0
    %v664 = vadd.f32 0.0, %v663
    %v665 = vpop.f32.mrb[0].mxu0
    %666 = vmatprep.mubr.f32.mxu0 0.0
    %667 = vmatmul.mubr.f32.gmra.mrb[0].mxu0 %v529
    %v668 = vpop.f32.mrb[0].mxu0
    %v669 = vadd.f32 0.0, %v668
    %v670 = vpop.f32.mrb[0].mxu0
    %671 = vmatprep.mubr.f32.mxu0 0.0
    %672 = vmatmul.mubr.f32.gmra.mrb[0].mxu0 %v532
    %v673 = vpop.f32.mrb[0].mxu0
    %v674 = vadd.f32 0.0, %v673
    %v675 = vpop.f32.mrb[0].mxu0
    %676 = vmatprep.mubr.f32.mxu0 0.0
    %677 = vmatmul.mubr.f32.gmra.mrb[0].mxu0 %v535
    %v678 = vpop.f32.mrb[0].mxu0
    %v679 = vadd.f32 0.0, %v678
    %v680 = vpop.f32.mrb[0].mxu0
    %681 = vmatprep.mubr.f32.mxu0 0.0
    %682 = vmatmul.mubr.f32.gmra.mrb[0].mxu0 %v538
    %v683 = vpop.f32.mrb[0].mxu0
    %v684 = vadd.f32 0.0, %v683
    %v685 = vpop.f32.mrb[0].mxu0
    %686 = vmatprep.mubr.f32.mxu0 0.0
    %687 = vmatmul.mubr.f32.gmra.mrb[0].mxu0 %v541
    %v688 = vpop.f32.mrb[0].mxu0
    %v689 = vadd.f32 0.0, %v688
    %v690 = vpop.f32.mrb[0].mxu0
    %691 = vdwg.mxu0
    %vm692 = vcmask 130048
    %v693 = vsel %vm692, %v411, -inf
    %694 = vmax.xlane.f32.xlu0 %v693
    %v695 = vpop.xlane.xlu0 %694
    %v696 = vsel %vm692, %v416, -inf
    %697 = vmax.xlane.f32.xlu0 %v696
    %v698 = vpop.xlane.xlu0 %697
    %v699 = vsel %vm692, %v421, -inf
    %700 = vmax.xlane.f32.xlu0 %v699
    %v701 = vpop.xlane.xlu0 %700
    %v702 = vsel %vm692, %v426, -inf
    %703 = vmax.xlane.f32.xlu0 %v702
    %v704 = vpop.xlane.xlu0 %703
    %v705 = vsel %vm692, %v431, -inf
    %706 = vmax.xlane.f32.xlu0 %v705
    %v707 = vpop.xlane.xlu0 %706
    %v708 = vsel %vm692, %v436, -inf
    %709 = vmax.xlane.f32.xlu0 %v708
    %v710 = vpop.xlane.xlu0 %709
    %v711 = vsel %vm692, %v441, -inf
    %712 = vmax.xlane.f32.xlu0 %v711
    %v713 = vpop.xlane.xlu0 %712
    %v714 = vsel %vm692, %v446, -inf
    %715 = vmax.xlane.f32.xlu0 %v714
    %v716 = vpop.xlane.xlu0 %715
    %v717 = vsel %vm692, %v451, -inf
    %718 = vmax.xlane.f32.xlu0 %v717
    %v719 = vpop.xlane.xlu0 %718
    %v720 = vsel %vm692, %v456, -inf
    %721 = vmax.xlane.f32.xlu0 %v720
    %v722 = vpop.xlane.xlu0 %721
    %v723 = vsel %vm692, %v461, -inf
    %724 = vmax.xlane.f32.xlu0 %v723
    %v725 = vpop.xlane.xlu0 %724
    %v726 = vsel %vm692, %v466, -inf
    %727 = vmax.xlane.f32.xlu0 %v726
    %v728 = vpop.xlane.xlu0 %727
    %v729 = vsel %vm692, %v471, -inf
    %730 = vmax.xlane.f32.xlu0 %v729
    %v731 = vpop.xlane.xlu0 %730
    %v732 = vsel %vm692, %v476, -inf
    %733 = vmax.xlane.f32.xlu0 %v732
    %v734 = vpop.xlane.xlu0 %733
    %v735 = vsel %vm692, %v481, -inf
    %736 = vmax.xlane.f32.xlu0 %v735
    %v737 = vpop.xlane.xlu0 %736
    %v738 = vsel %vm692, %v486, -inf
    %739 = vmax.xlane.f32.xlu0 %v738
    %v740 = vpop.xlane.xlu0 %739
    %v741 = vsel %vm692, %v614, -inf
    %742 = vmax.xlane.f32.xlu0 %v741
    %v743 = vpop.xlane.xlu0 %742
    %v744 = vsel %vm692, %v619, -inf
    %745 = vmax.xlane.f32.xlu0 %v744
    %v746 = vpop.xlane.xlu0 %745
    %v747 = vsel %vm692, %v624, -inf
    %748 = vmax.xlane.f32.xlu0 %v747
    %v749 = vpop.xlane.xlu0 %748
    %v750 = vsel %vm692, %v629, -inf
    %751 = vmax.xlane.f32.xlu0 %v750
    %v752 = vpop.xlane.xlu0 %751
    %v753 = vsel %vm692, %v634, -inf
    %754 = vmax.xlane.f32.xlu0 %v753
    %v755 = vpop.xlane.xlu0 %754
    %v756 = vsel %vm692, %v639, -inf
    %757 = vmax.xlane.f32.xlu0 %v756
    %v758 = vpop.xlane.xlu0 %757
    %v759 = vsel %vm692, %v644, -inf
    %760 = vmax.xlane.f32.xlu0 %v759
    %v761 = vpop.xlane.xlu0 %760
    %v762 = vsel %vm692, %v649, -inf
    %763 = vmax.xlane.f32.xlu0 %v762
    %v764 = vpop.xlane.xlu0 %763
    %v765 = vsel %vm692, %v654, -inf
    %766 = vmax.xlane.f32.xlu0 %v765
    %v767 = vpop.xlane.xlu0 %766
    %v768 = vsel %vm692, %v659, -inf
    %769 = vmax.xlane.f32.xlu0 %v768
    %v770 = vpop.xlane.xlu0 %769
    %v771 = vsel %vm692, %v664, -inf
    %772 = vmax.xlane.f32.xlu0 %v771
    %v773 = vpop.xlane.xlu0 %772
    %v774 = vsel %vm692, %v669, -inf
    %775 = vmax.xlane.f32.xlu0 %v774
    %v776 = vpop.xlane.xlu0 %775
    %v777 = vsel %vm692, %v674, -inf
    %778 = vmax.xlane.f32.xlu0 %v777
    %v779 = vpop.xlane.xlu0 %778
    %v780 = vsel %vm692, %v679, -inf
    %781 = vmax.xlane.f32.xlu0 %v780
    %v782 = vpop.xlane.xlu0 %781
    %v783 = vsel %vm692, %v684, -inf
    %784 = vmax.xlane.f32.xlu0 %v783
    %v785 = vpop.xlane.xlu0 %784
    %v786 = vsel %vm692, %v689, -inf
    %787 = vmax.xlane.f32.xlu0 %v786
    %v788 = vpop.xlane.xlu0 %787
    %v789 = vsub.f32 %v411, %v695
    %v790 = vsub.f32 %v416, %v698
    %v791 = vsub.f32 %v421, %v701
    %v792 = vsub.f32 %v426, %v704
    %v793 = vsub.f32 %v431, %v707
    %v794 = vsub.f32 %v436, %v710
    %v795 = vsub.f32 %v441, %v713
    %v796 = vsub.f32 %v446, %v716
    %v797 = vsub.f32 %v451, %v719
    %v798 = vsub.f32 %v456, %v722
    %v799 = vsub.f32 %v461, %v725
    %v800 = vsub.f32 %v466, %v728
    %v801 = vsub.f32 %v471, %v731
    %v802 = vsub.f32 %v476, %v734
    %v803 = vsub.f32 %v481, %v737
    %v804 = vsub.f32 %v486, %v740
    %v805 = vsub.f32 %v614, %v743
    %v806 = vsub.f32 %v619, %v746
    %v807 = vsub.f32 %v624, %v749
    %v808 = vsub.f32 %v629, %v752
    %v809 = vsub.f32 %v634, %v755
    %v810 = vsub.f32 %v639, %v758
    %v811 = vsub.f32 %v644, %v761
    %v812 = vsub.f32 %v649, %v764
    %v813 = vsub.f32 %v654, %v767
    %v814 = vsub.f32 %v659, %v770
    %v815 = vsub.f32 %v664, %v773
    %v816 = vsub.f32 %v669, %v776
    %v817 = vsub.f32 %v674, %v779
    %v818 = vsub.f32 %v679, %v782
    %v819 = vsub.f32 %v684, %v785
    %v820 = vsub.f32 %v689, %v788
    %v821 = vmul.f32 %v789, 1.442695
    %v822 = vpow.pop %v821
    %v823 = vmul.f32 %v790, 1.442695
    %v824 = vpow.pop %v823
    %v825 = vmul.f32 %v791, 1.442695
    %v826 = vpow.pop %v825
    %v827 = vmul.f32 %v792, 1.442695
    %v828 = vpow.pop %v827
    %v829 = vmul.f32 %v793, 1.442695
    %v830 = vpow.pop %v829
    %v831 = vmul.f32 %v794, 1.442695
    %v832 = vpow.pop %v831
    %v833 = vmul.f32 %v795, 1.442695
    %v834 = vpow.pop %v833
    %v835 = vmul.f32 %v796, 1.442695
    %v836 = vpow.pop %v835
    %v837 = vmul.f32 %v797, 1.442695
    %v838 = vpow.pop %v837
    %v839 = vmul.f32 %v798, 1.442695
    %v840 = vpow.pop %v839
    %v841 = vmul.f32 %v799, 1.442695
    %v842 = vpow.pop %v841
    %v843 = vmul.f32 %v800, 1.442695
    %v844 = vpow.pop %v843
    %v845 = vmul.f32 %v801, 1.442695
    %v846 = vpow.pop %v845
    %v847 = vmul.f32 %v802, 1.442695
    %v848 = vpow.pop %v847
    %v849 = vmul.f32 %v803, 1.442695
    %v850 = vpow.pop %v849
    %v851 = vmul.f32 %v804, 1.442695
    %v852 = vpow.pop %v851
    %v853 = vmul.f32 %v805, 1.442695
    %v854 = vpow.pop %v853
    %v855 = vmul.f32 %v806, 1.442695
    %v856 = vpow.pop %v855
    %v857 = vmul.f32 %v807, 1.442695
    %v858 = vpow.pop %v857
    %v859 = vmul.f32 %v808, 1.442695
    %v860 = vpow.pop %v859
    %v861 = vmul.f32 %v809, 1.442695
    %v862 = vpow.pop %v861
    %v863 = vmul.f32 %v810, 1.442695
    %v864 = vpow.pop %v863
    %v865 = vmul.f32 %v811, 1.442695
    %v866 = vpow.pop %v865
    %v867 = vmul.f32 %v812, 1.442695
    %v868 = vpow.pop %v867
    %v869 = vmul.f32 %v813, 1.442695
    %v870 = vpow.pop %v869
    %v871 = vmul.f32 %v814, 1.442695
    %v872 = vpow.pop %v871
    %v873 = vmul.f32 %v815, 1.442695
    %v874 = vpow.pop %v873
    %v875 = vmul.f32 %v816, 1.442695
    %v876 = vpow.pop %v875
    %v877 = vmul.f32 %v817, 1.442695
    %v878 = vpow.pop %v877
    %v879 = vmul.f32 %v818, 1.442695
    %v880 = vpow.pop %v879
    %v881 = vmul.f32 %v819, 1.442695
    %v882 = vpow.pop %v881
    %v883 = vmul.f32 %v820, 1.442695
    %v884 = vpow.pop %v883
    %v885 = vsel %vm692, %v822, 0.0
    %886 = vadd.xlane.f32.xlu0 %v885
    %v887 = vpop.xlane.xlu0 %886
    %v888 = vsel %vm692, %v824, 0.0
    %889 = vadd.xlane.f32.xlu0 %v888
    %v890 = vpop.xlane.xlu0 %889
    %v891 = vsel %vm692, %v826, 0.0
    %892 = vadd.xlane.f32.xlu0 %v891
    %v893 = vpop.xlane.xlu0 %892
    %v894 = vsel %vm692, %v828, 0.0
    %895 = vadd.xlane.f32.xlu0 %v894
    %v896 = vpop.xlane.xlu0 %895
    %v897 = vsel %vm692, %v830, 0.0
    %898 = vadd.xlane.f32.xlu0 %v897
    %v899 = vpop.xlane.xlu0 %898
    %v900 = vsel %vm692, %v832, 0.0
    %901 = vadd.xlane.f32.xlu0 %v900
    %v902 = vpop.xlane.xlu0 %901
    %v903 = vsel %vm692, %v834, 0.0
    %904 = vadd.xlane.f32.xlu0 %v903
    %v905 = vpop.xlane.xlu0 %904
    %v906 = vsel %vm692, %v836, 0.0
    %907 = vadd.xlane.f32.xlu0 %v906
    %v908 = vpop.xlane.xlu0 %907
    %v909 = vsel %vm692, %v838, 0.0
    %910 = vadd.xlane.f32.xlu0 %v909
    %v911 = vpop.xlane.xlu0 %910
    %v912 = vsel %vm692, %v840, 0.0
    %913 = vadd.xlane.f32.xlu0 %v912
    %v914 = vpop.xlane.xlu0 %913
    %v915 = vsel %vm692, %v842, 0.0
    %916 = vadd.xlane.f32.xlu0 %v915
    %v917 = vpop.xlane.xlu0 %916
    %v918 = vsel %vm692, %v844, 0.0
    %919 = vadd.xlane.f32.xlu0 %v918
    %v920 = vpop.xlane.xlu0 %919
    %v921 = vsel %vm692, %v846, 0.0
    %922 = vadd.xlane.f32.xlu0 %v921
    %v923 = vpop.xlane.xlu0 %922
    %v924 = vsel %vm692, %v848, 0.0
    %925 = vadd.xlane.f32.xlu0 %v924
    %v926 = vpop.xlane.xlu0 %925
    %v927 = vsel %vm692, %v850, 0.0
    %928 = vadd.xlane.f32.xlu0 %v927
    %v929 = vpop.xlane.xlu0 %928
    %v930 = vsel %vm692, %v852, 0.0
    %931 = vadd.xlane.f32.xlu0 %v930
    %v932 = vpop.xlane.xlu0 %931
    %v933 = vsel %vm692, %v854, 0.0
    %934 = vadd.xlane.f32.xlu0 %v933
    %v935 = vpop.xlane.xlu0 %934
    %v936 = vsel %vm692, %v856, 0.0
    %937 = vadd.xlane.f32.xlu0 %v936
    %v938 = vpop.xlane.xlu0 %937
    %v939 = vsel %vm692, %v858, 0.0
    %940 = vadd.xlane.f32.xlu0 %v939
    %v941 = vpop.xlane.xlu0 %940
    %v942 = vsel %vm692, %v860, 0.0
    %943 = vadd.xlane.f32.xlu0 %v942
    %v944 = vpop.xlane.xlu0 %943
    %v945 = vsel %vm692, %v862, 0.0
    %946 = vadd.xlane.f32.xlu0 %v945
    %v947 = vpop.xlane.xlu0 %946
    %v948 = vsel %vm692, %v864, 0.0
    %949 = vadd.xlane.f32.xlu0 %v948
    %v950 = vpop.xlane.xlu0 %949
    %v951 = vsel %vm692, %v866, 0.0
    %952 = vadd.xlane.f32.xlu0 %v951
    %v953 = vpop.xlane.xlu0 %952
    %v954 = vsel %vm692, %v868, 0.0
    %955 = vadd.xlane.f32.xlu0 %v954
    %v956 = vpop.xlane.xlu0 %955
    %v957 = vsel %vm692, %v870, 0.0
    %958 = vadd.xlane.f32.xlu0 %v957
    %v959 = vpop.xlane.xlu0 %958
    %v960 = vsel %vm692, %v872, 0.0
    %961 = vadd.xlane.f32.xlu0 %v960
    %v962 = vpop.xlane.xlu0 %961
    %v963 = vsel %vm692, %v874, 0.0
    %964 = vadd.xlane.f32.xlu0 %v963
    %v965 = vpop.xlane.xlu0 %964
    %v966 = vsel %vm692, %v876, 0.0
    %967 = vadd.xlane.f32.xlu0 %v966
    %v968 = vpop.xlane.xlu0 %967
    %v969 = vsel %vm692, %v878, 0.0
    %970 = vadd.xlane.f32.xlu0 %v969
    %v971 = vpop.xlane.xlu0 %970
    %v972 = vsel %vm692, %v880, 0.0
    %973 = vadd.xlane.f32.xlu0 %v972
    %v974 = vpop.xlane.xlu0 %973
    %v975 = vsel %vm692, %v882, 0.0
    %976 = vadd.xlane.f32.xlu0 %v975
    %v977 = vpop.xlane.xlu0 %976
    %v978 = vsel %vm692, %v884, 0.0
    %979 = vadd.xlane.f32.xlu0 %v978
    %v980 = vpop.xlane.xlu0 %979
    %v981 = vrcp.pop %v887
    %v982 = vrcp.pop %v890
    %v983 = vrcp.pop %v893
    %v984 = vrcp.pop %v896
    %v985 = vrcp.pop %v899
    %v986 = vrcp.pop %v902
    %v987 = vrcp.pop %v905
    %v988 = vrcp.pop %v908
    %v989 = vrcp.pop %v911
    %v990 = vrcp.pop %v914
    %v991 = vrcp.pop %v917
    %v992 = vrcp.pop %v920
    %v993 = vrcp.pop %v923
    %v994 = vrcp.pop %v926
    %v995 = vrcp.pop %v929
    %v996 = vrcp.pop %v932
    %v997 = vrcp.pop %v935
    %v998 = vrcp.pop %v938
    %v999 = vrcp.pop %v941
    %v1000 = vrcp.pop %v944
    %v1001 = vrcp.pop %v947
    %v1002 = vrcp.pop %v950
    %v1003 = vrcp.pop %v953
    %v1004 = vrcp.pop %v956
    %v1005 = vrcp.pop %v959
    %v1006 = vrcp.pop %v962
    %v1007 = vrcp.pop %v965
    %v1008 = vrcp.pop %v968
    %v1009 = vrcp.pop %v971
    %v1010 = vrcp.pop %v974
    %v1011 = vrcp.pop %v977
    %v1012 = vrcp.pop %v980
    %v1013 = vmul.f32 %v822, %v981
    %v1014 = vmul.f32 %v824, %v982
    %v1015 = vmul.f32 %v826, %v983
    %v1016 = vmul.f32 %v828, %v984
    %v1017 = vmul.f32 %v830, %v985
    %v1018 = vmul.f32 %v832, %v986
    %v1019 = vmul.f32 %v834, %v987
    %v1020 = vmul.f32 %v836, %v988
    %v1021 = vmul.f32 %v838, %v989
    %v1022 = vmul.f32 %v840, %v990
    %v1023 = vmul.f32 %v842, %v991
    %v1024 = vmul.f32 %v844, %v992
    %v1025 = vmul.f32 %v846, %v993
    %v1026 = vmul.f32 %v848, %v994
    %v1027 = vmul.f32 %v850, %v995
    %v1028 = vmul.f32 %v852, %v996
    %v1029 = vmul.f32 %v854, %v997
    %v1030 = vmul.f32 %v856, %v998
    %v1031 = vmul.f32 %v858, %v999
    %v1032 = vmul.f32 %v860, %v1000
    %v1033 = vmul.f32 %v862, %v1001
    %v1034 = vmul.f32 %v864, %v1002
    %v1035 = vmul.f32 %v866, %v1003
    %v1036 = vmul.f32 %v868, %v1004
    %v1037 = vmul.f32 %v870, %v1005
    %v1038 = vmul.f32 %v872, %v1006
    %v1039 = vmul.f32 %v874, %v1007
    %v1040 = vmul.f32 %v876, %v1008
    %v1041 = vmul.f32 %v878, %v1009
    %v1042 = vmul.f32 %v880, %v1010
    %v1043 = vmul.f32 %v882, %v1011
    %v1044 = vmul.f32 %v884, %v1012
    %1045 = vrot.lane.b32.xlu0 %v146, 64
    %v1046 = vpop.permute.xlu0 %1045
    %1047 = vrot.lane.b32.xlu0 %v151, 64
    %v1048 = vpop.permute.xlu0 %1047
    %v1052 = vsel %vm692, %v1013, 0
    %v1055 = vsel %vm692, %v1014, 0
    %v1058 = vsel %vm692, %v1015, 0
    %v1061 = vsel %vm692, %v1016, 0
    %v1064 = vsel %vm692, %v1017, 0
    %v1067 = vsel %vm692, %v1018, 0
    %v1070 = vsel %vm692, %v1019, 0
    %v1073 = vsel %vm692, %v1020, 0
    %v1076 = vsel %vm692, %v1021, 0
    %v1079 = vsel %vm692, %v1022, 0
    %v1082 = vsel %vm692, %v1023, 0
    %v1085 = vsel %vm692, %v1024, 0
    %v1088 = vsel %vm692, %v1025, 0
    %v1091 = vsel %vm692, %v1026, 0
    %v1094 = vsel %vm692, %v1027, 0
    %v1097 = vsel %vm692, %v1028, 0
    %1099 = vmatprep.subr.mxu0 0.0
    %1100 = vmatpush1.msra.mxu0 %v1046
    %1101 = vmatprep.subr.mxu0 0.0
    %1102 = vmatpush1.msra.mxu0 %v1048
    %1103 = vmatprep.subr.mxu0 0.0
    %1104 = vmatpush1.msra.mxu0 0.0
    %1105 = vmatprep.subr.mxu0 0.0
    %1106 = vmatpush1.msra.mxu0 0.0
    %1107 = vmatprep.subr.mxu0 0.0
    %1108 = vmatpush1.msra.mxu0 0.0
    %1109 = vmatprep.subr.mxu0 0.0
    %1110 = vmatpush1.msra.mxu0 0.0
    %1111 = vmatprep.subr.mxu0 0.0
    %1112 = vmatpush1.msra.mxu0 0.0
    %1113 = vmatprep.subr.mxu0 0.0
    %1114 = vmatpush1.msra.mxu0 0.0
    %1115 = vmatprep.subr.mxu0 0.0
    %1116 = vmatpush1.msra.mxu0 0.0
    %1117 = vmatprep.subr.mxu0 0.0
    %1118 = vmatpush1.msra.mxu0 0.0
    %1119 = vmatprep.subr.mxu0 0.0
    %1120 = vmatpush1.msra.mxu0 0.0
    %1121 = vmatprep.subr.mxu0 0.0
    %1122 = vmatpush1.msra.mxu0 0.0
    %1123 = vmatprep.subr.mxu0 0.0
    %1124 = vmatpush1.msra.mxu0 0.0
    %1125 = vmatprep.subr.mxu0 0.0
    %1126 = vmatpush1.msra.mxu0 0.0
    %1127 = vmatprep.subr.mxu0 0.0
    %1128 = vmatpush1.msra.mxu0 0.0
    %1129 = vmatprep.subr.mxu0 0.0
    %1130 = vmatpush1.msra.mxu0 0.0
    %1131 = vmatprep.subr.mxu0 0.0
    %1132 = vmatpush1.msra.mxu0 0.0
    %1133 = vmatprep.subr.mxu0 0.0
    %1134 = vmatpush1.msra.mxu0 0.0
    %1135 = vmatprep.subr.mxu0 0.0
    %1136 = vmatpush1.msra.mxu0 0.0
    %1137 = vmatprep.subr.mxu0 0.0
    %1138 = vmatpush1.msra.mxu0 0.0
    %1139 = vmatprep.subr.mxu0 0.0
    %1140 = vmatpush1.msra.mxu0 0.0
    %1141 = vmatprep.subr.mxu0 0.0
    %1142 = vmatpush1.msra.mxu0 0.0
    %1143 = vmatprep.subr.mxu0 0.0
    %1144 = vmatpush1.msra.mxu0 0.0
    %1145 = vmatprep.subr.mxu0 0.0
    %1146 = vmatpush1.msra.mxu0 0.0
    %1147 = vmatprep.subr.mxu0 0.0
    %1148 = vmatpush1.msra.mxu0 0.0
    %1149 = vmatprep.subr.mxu0 0.0
    %1150 = vmatpush1.msra.mxu0 0.0
    %1151 = vmatprep.subr.mxu0 0.0
    %1152 = vmatpush1.msra.mxu0 0.0
    %1153 = vmatprep.subr.mxu0 0.0
    %1154 = vmatpush1.msra.mxu0 0.0
    %1155 = vmatprep.subr.mxu0 0.0
    %1156 = vmatpush1.msra.mxu0 0.0
    %1157 = vmatprep.subr.mxu0 0.0
    %1158 = vmatpush1.msra.mxu0 0.0
    %1159 = vmatprep.subr.mxu0 0.0
    %1160 = vmatpush1.msra.mxu0 0.0
    %1161 = vmatprep.subr.mxu0 0.0
    %1162 = vmatpush1.msra.mxu0 0.0
    %1163 = vmatprep.mubr.f32.mxu0 0.0
    %1164 = vmatmul.mubr.f32.gmra.mrb[0].mxu0 %v1052
    %v1165 = vpop.f32.mrb[0].mxu0
    %v1166 = vadd.f32 0.0, %v1165
    %v1167 = vpop.f32.mrb[0].mxu0
    %1168 = vmatprep.mubr.f32.mxu0 0.0
    %1169 = vmatmul.mubr.f32.gmra.mrb[0].mxu0 %v1055
    %v1170 = vpop.f32.mrb[0].mxu0
    %v1171 = vadd.f32 0.0, %v1170
    %v1172 = vpop.f32.mrb[0].mxu0
    %1173 = vmatprep.mubr.f32.mxu0 0.0
    %1174 = vmatmul.mubr.f32.gmra.mrb[0].mxu0 %v1058
    %v1175 = vpop.f32.mrb[0].mxu0
    %v1176 = vadd.f32 0.0, %v1175
    %v1177 = vpop.f32.mrb[0].mxu0
    %1178 = vmatprep.mubr.f32.mxu0 0.0
    %1179 = vmatmul.mubr.f32.gmra.mrb[0].mxu0 %v1061
    %v1180 = vpop.f32.mrb[0].mxu0
    %v1181 = vadd.f32 0.0, %v1180
    %v1182 = vpop.f32.mrb[0].mxu0
    %1183 = vmatprep.mubr.f32.mxu0 0.0
    %1184 = vmatmul.mubr.f32.gmra.mrb[0].mxu0 %v1064
    %v1185 = vpop.f32.mrb[0].mxu0
    %v1186 = vadd.f32 0.0, %v1185
    %v1187 = vpop.f32.mrb[0].mxu0
    %1188 = vmatprep.mubr.f32.mxu0 0.0
    %1189 = vmatmul.mubr.f32.gmra.mrb[0].mxu0 %v1067
    %v1190 = vpop.f32.mrb[0].mxu0
    %v1191 = vadd.f32 0.0, %v1190
    %v1192 = vpop.f32.mrb[0].mxu0
    %1193 = vmatprep.mubr.f32.mxu0 0.0
    %1194 = vmatmul.mubr.f32.gmra.mrb[0].mxu0 %v1070
    %v1195 = vpop.f32.mrb[0].mxu0
    %v1196 = vadd.f32 0.0, %v1195
    %v1197 = vpop.f32.mrb[0].mxu0
    %1198 = vmatprep.mubr.f32.mxu0 0.0
    %1199 = vmatmul.mubr.f32.gmra.mrb[0].mxu0 %v1073
    %v1200 = vpop.f32.mrb[0].mxu0
    %v1201 = vadd.f32 0.0, %v1200
    %v1202 = vpop.f32.mrb[0].mxu0
    %1203 = vmatprep.mubr.f32.mxu0 0.0
    %1204 = vmatmul.mubr.f32.gmra.mrb[0].mxu0 %v1076
    %v1205 = vpop.f32.mrb[0].mxu0
    %v1206 = vadd.f32 0.0, %v1205
    %v1207 = vpop.f32.mrb[0].mxu0
    %1208 = vmatprep.mubr.f32.mxu0 0.0
    %1209 = vmatmul.mubr.f32.gmra.mrb[0].mxu0 %v1079
    %v1210 = vpop.f32.mrb[0].mxu0
    %v1211 = vadd.f32 0.0, %v1210
    %v1212 = vpop.f32.mrb[0].mxu0
    %1213 = vmatprep.mubr.f32.mxu0 0.0
    %1214 = vmatmul.mubr.f32.gmra.mrb[0].mxu0 %v1082
    %v1215 = vpop.f32.mrb[0].mxu0
    %v1216 = vadd.f32 0.0, %v1215
    %v1217 = vpop.f32.mrb[0].mxu0
    %1218 = vmatprep.mubr.f32.mxu0 0.0
    %1219 = vmatmul.mubr.f32.gmra.mrb[0].mxu0 %v1085
    %v1220 = vpop.f32.mrb[0].mxu0
    %v1221 = vadd.f32 0.0, %v1220
    %v1222 = vpop.f32.mrb[0].mxu0
    %1223 = vmatprep.mubr.f32.mxu0 0.0
    %1224 = vmatmul.mubr.f32.gmra.mrb[0].mxu0 %v1088
    %v1225 = vpop.f32.mrb[0].mxu0
    %v1226 = vadd.f32 0.0, %v1225
    %v1227 = vpop.f32.mrb[0].mxu0
    %1228 = vmatprep.mubr.f32.mxu0 0.0
    %1229 = vmatmul.mubr.f32.gmra.mrb[0].mxu0 %v1091
    %v1230 = vpop.f32.mrb[0].mxu0
    %v1231 = vadd.f32 0.0, %v1230
    %v1232 = vpop.f32.mrb[0].mxu0
    %1233 = vmatprep.mubr.f32.mxu0 0.0
    %1234 = vmatmul.mubr.f32.gmra.mrb[0].mxu0 %v1094
    %v1235 = vpop.f32.mrb[0].mxu0
    %v1236 = vadd.f32 0.0, %v1235
    %v1237 = vpop.f32.mrb[0].mxu0
    %1238 = vmatprep.mubr.f32.mxu0 0.0
    %1239 = vmatmul.mubr.f32.gmra.mrb[0].mxu0 %v1097
    %v1240 = vpop.f32.mrb[0].mxu0
    %v1241 = vadd.f32 0.0, %v1240
    %v1242 = vpop.f32.mrb[0].mxu0
    %1243 = vdwg.mxu0
    %1244 = vrot.lane.b32.xlu0 %v156, 64
    %v1245 = vpop.permute.xlu0 %1244
    %1246 = vrot.lane.b32.xlu0 %v161, 64
    %v1247 = vpop.permute.xlu0 %1246
    %v1251 = vsel %vm692, %v1029, 0
    %v1254 = vsel %vm692, %v1030, 0
    %v1257 = vsel %vm692, %v1031, 0
    %v1260 = vsel %vm692, %v1032, 0
    %v1263 = vsel %vm692, %v1033, 0
    %v1266 = vsel %vm692, %v1034, 0
    %v1269 = vsel %vm692, %v1035, 0
    %v1272 = vsel %vm692, %v1036, 0
    %v1275 = vsel %vm692, %v1037, 0
    %v1278 = vsel %vm692, %v1038, 0
    %v1281 = vsel %vm692, %v1039, 0
    %v1284 = vsel %vm692, %v1040, 0
    %v1287 = vsel %vm692, %v1041, 0
    %v1290 = vsel %vm692, %v1042, 0
    %v1293 = vsel %vm692, %v1043, 0
    %v1296 = vsel %vm692, %v1044, 0
    %1298 = vmatprep.subr.mxu0 0.0
    %1299 = vmatpush1.msra.mxu0 %v1245
    %1300 = vmatprep.subr.mxu0 0.0
    %1301 = vmatpush1.msra.mxu0 %v1247
    %1302 = vmatprep.subr.mxu0 0.0
    %1303 = vmatpush1.msra.mxu0 0.0
    %1304 = vmatprep.subr.mxu0 0.0
    %1305 = vmatpush1.msra.mxu0 0.0
    %1306 = vmatprep.subr.mxu0 0.0
    %1307 = vmatpush1.msra.mxu0 0.0
    %1308 = vmatprep.subr.mxu0 0.0
    %1309 = vmatpush1.msra.mxu0 0.0
    %1310 = vmatprep.subr.mxu0 0.0
    %1311 = vmatpush1.msra.mxu0 0.0
    %1312 = vmatprep.subr.mxu0 0.0
    %1313 = vmatpush1.msra.mxu0 0.0
    %1314 = vmatprep.subr.mxu0 0.0
    %1315 = vmatpush1.msra.mxu0 0.0
    %1316 = vmatprep.subr.mxu0 0.0
    %1317 = vmatpush1.msra.mxu0 0.0
    %1318 = vmatprep.subr.mxu0 0.0
    %1319 = vmatpush1.msra.mxu0 0.0
    %1320 = vmatprep.subr.mxu0 0.0
    %1321 = vmatpush1.msra.mxu0 0.0
    %1322 = vmatprep.subr.mxu0 0.0
    %1323 = vmatpush1.msra.mxu0 0.0
    %1324 = vmatprep.subr.mxu0 0.0
    %1325 = vmatpush1.msra.mxu0 0.0
    %1326 = vmatprep.subr.mxu0 0.0
    %1327 = vmatpush1.msra.mxu0 0.0
    %1328 = vmatprep.subr.mxu0 0.0
    %1329 = vmatpush1.msra.mxu0 0.0
    %1330 = vmatprep.subr.mxu0 0.0
    %1331 = vmatpush1.msra.mxu0 0.0
    %1332 = vmatprep.subr.mxu0 0.0
    %1333 = vmatpush1.msra.mxu0 0.0
    %1334 = vmatprep.subr.mxu0 0.0
    %1335 = vmatpush1.msra.mxu0 0.0
    %1336 = vmatprep.subr.mxu0 0.0
    %1337 = vmatpush1.msra.mxu0 0.0
    %1338 = vmatprep.subr.mxu0 0.0
    %1339 = vmatpush1.msra.mxu0 0.0
    %1340 = vmatprep.subr.mxu0 0.0
    %1341 = vmatpush1.msra.mxu0 0.0
    %1342 = vmatprep.subr.mxu0 0.0
    %1343 = vmatpush1.msra.mxu0 0.0
    %1344 = vmatprep.subr.mxu0 0.0
    %1345 = vmatpush1.msra.mxu0 0.0
    %1346 = vmatprep.subr.mxu0 0.0
    %1347 = vmatpush1.msra.mxu0 0.0
    %1348 = vmatprep.subr.mxu0 0.0
    %1349 = vmatpush1.msra.mxu0 0.0
    %1350 = vmatprep.subr.mxu0 0.0
    %1351 = vmatpush1.msra.mxu0 0.0
    %1352 = vmatprep.subr.mxu0 0.0
    %1353 = vmatpush1.msra.mxu0 0.0
    %1354 = vmatprep.subr.mxu0 0.0
    %1355 = vmatpush1.msra.mxu0 0.0
    %1356 = vmatprep.subr.mxu0 0.0
    %1357 = vmatpush1.msra.mxu0 0.0
    %1358 = vmatprep.subr.mxu0 0.0
    %1359 = vmatpush1.msra.mxu0 0.0
    %1360 = vmatprep.subr.mxu0 0.0
    %1361 = vmatpush1.msra.mxu0 0.0
    %1362 = vmatprep.mubr.f32.mxu0 0.0
    %1363 = vmatmul.mubr.f32.gmra.mrb[0].mxu0 %v1251
    %v1364 = vpop.f32.mrb[0].mxu0
    %v1365 = vadd.f32 0.0, %v1364
    %v1366 = vpop.f32.mrb[0].mxu0
    %1367 = vmatprep.mubr.f32.mxu0 0.0
    %1368 = vmatmul.mubr.f32.gmra.mrb[0].mxu0 %v1254
    %v1369 = vpop.f32.mrb[0].mxu0
    %v1370 = vadd.f32 0.0, %v1369
    %v1371 = vpop.f32.mrb[0].mxu0
    %1372 = vmatprep.mubr.f32.mxu0 0.0
    %1373 = vmatmul.mubr.f32.gmra.mrb[0].mxu0 %v1257
    %v1374 = vpop.f32.mrb[0].mxu0
    %v1375 = vadd.f32 0.0, %v1374
    %v1376 = vpop.f32.mrb[0].mxu0
    %1377 = vmatprep.mubr.f32.mxu0 0.0
    %1378 = vmatmul.mubr.f32.gmra.mrb[0].mxu0 %v1260
    %v1379 = vpop.f32.mrb[0].mxu0
    %v1380 = vadd.f32 0.0, %v1379
    %v1381 = vpop.f32.mrb[0].mxu0
    %1382 = vmatprep.mubr.f32.mxu0 0.0
    %1383 = vmatmul.mubr.f32.gmra.mrb[0].mxu0 %v1263
    %v1384 = vpop.f32.mrb[0].mxu0
    %v1385 = vadd.f32 0.0, %v1384
    %v1386 = vpop.f32.mrb[0].mxu0
    %1387 = vmatprep.mubr.f32.mxu0 0.0
    %1388 = vmatmul.mubr.f32.gmra.mrb[0].mxu0 %v1266
    %v1389 = vpop.f32.mrb[0].mxu0
    %v1390 = vadd.f32 0.0, %v1389
    %v1391 = vpop.f32.mrb[0].mxu0
    %1392 = vmatprep.mubr.f32.mxu0 0.0
    %1393 = vmatmul.mubr.f32.gmra.mrb[0].mxu0 %v1269
    %v1394 = vpop.f32.mrb[0].mxu0
    %v1395 = vadd.f32 0.0, %v1394
    %v1396 = vpop.f32.mrb[0].mxu0
    %1397 = vmatprep.mubr.f32.mxu0 0.0
    %1398 = vmatmul.mubr.f32.gmra.mrb[0].mxu0 %v1272
    %v1399 = vpop.f32.mrb[0].mxu0
    %v1400 = vadd.f32 0.0, %v1399
    %v1401 = vpop.f32.mrb[0].mxu0
    %1402 = vmatprep.mubr.f32.mxu0 0.0
    %1403 = vmatmul.mubr.f32.gmra.mrb[0].mxu0 %v1275
    %v1404 = vpop.f32.mrb[0].mxu0
    %v1405 = vadd.f32 0.0, %v1404
    %v1406 = vpop.f32.mrb[0].mxu0
    %1407 = vmatprep.mubr.f32.mxu0 0.0
    %1408 = vmatmul.mubr.f32.gmra.mrb[0].mxu0 %v1278
    %v1409 = vpop.f32.mrb[0].mxu0
    %v1410 = vadd.f32 0.0, %v1409
    %v1411 = vpop.f32.mrb[0].mxu0
    %1412 = vmatprep.mubr.f32.mxu0 0.0
    %1413 = vmatmul.mubr.f32.gmra.mrb[0].mxu0 %v1281
    %v1414 = vpop.f32.mrb[0].mxu0
    %v1415 = vadd.f32 0.0, %v1414
    %v1416 = vpop.f32.mrb[0].mxu0
    %1417 = vmatprep.mubr.f32.mxu0 0.0
    %1418 = vmatmul.mubr.f32.gmra.mrb[0].mxu0 %v1284
    %v1419 = vpop.f32.mrb[0].mxu0
    %v1420 = vadd.f32 0.0, %v1419
    %v1421 = vpop.f32.mrb[0].mxu0
    %1422 = vmatprep.mubr.f32.mxu0 0.0
    %1423 = vmatmul.mubr.f32.gmra.mrb[0].mxu0 %v1287
    %v1424 = vpop.f32.mrb[0].mxu0
    %v1425 = vadd.f32 0.0, %v1424
    %v1426 = vpop.f32.mrb[0].mxu0
    %1427 = vmatprep.mubr.f32.mxu0 0.0
    %1428 = vmatmul.mubr.f32.gmra.mrb[0].mxu0 %v1290
    %v1429 = vpop.f32.mrb[0].mxu0
    %v1430 = vadd.f32 0.0, %v1429
    %v1431 = vpop.f32.mrb[0].mxu0
    %1432 = vmatprep.mubr.f32.mxu0 0.0
    %1433 = vmatmul.mubr.f32.gmra.mrb[0].mxu0 %v1293
    %v1434 = vpop.f32.mrb[0].mxu0
    %v1435 = vadd.f32 0.0, %v1434
    %v1436 = vpop.f32.mrb[0].mxu0
    %1437 = vmatprep.mubr.f32.mxu0 0.0
    %1438 = vmatmul.mubr.f32.gmra.mrb[0].mxu0 %v1296
    %v1439 = vpop.f32.mrb[0].mxu0
    %v1440 = vadd.f32 0.0, %v1439
    %v1441 = vpop.f32.mrb[0].mxu0
    %1442 = vdwg.mxu0
    %v1443 = vmul.f32 %v1166, %v217
    %v1444 = vmul.f32 %v1171, %v217
    %v1445 = vmul.f32 %v1176, %v221
    %v1446 = vmul.f32 %v1181, %v221
    %v1447 = vmul.f32 %v1186, %v225
    %v1448 = vmul.f32 %v1191, %v225
    %v1449 = vmul.f32 %v1196, %v229
    %v1450 = vmul.f32 %v1201, %v229
    %v1451 = vmul.f32 %v1206, %v233
    %v1452 = vmul.f32 %v1211, %v233
    %v1453 = vmul.f32 %v1216, %v237
    %v1454 = vmul.f32 %v1221, %v237
    %v1455 = vmul.f32 %v1226, %v241
    %v1456 = vmul.f32 %v1231, %v241
    %v1457 = vmul.f32 %v1236, %v245
    %v1458 = vmul.f32 %v1241, %v245
    %v1459 = vmul.f32 %v1365, %v217
    %v1460 = vmul.f32 %v1370, %v217
    %v1461 = vmul.f32 %v1375, %v221
    %v1462 = vmul.f32 %v1380, %v221
    %v1463 = vmul.f32 %v1385, %v225
    %v1464 = vmul.f32 %v1390, %v225
    %v1465 = vmul.f32 %v1395, %v229
    %v1466 = vmul.f32 %v1400, %v229
    %v1467 = vmul.f32 %v1405, %v233
    %v1468 = vmul.f32 %v1410, %v233
    %v1469 = vmul.f32 %v1415, %v237
    %v1470 = vmul.f32 %v1420, %v237
    %v1471 = vmul.f32 %v1425, %v241
    %v1472 = vmul.f32 %v1430, %v241
    %v1473 = vmul.f32 %v1435, %v245
    %v1474 = vmul.f32 %v1440, %v245
    %v1475 = vsel %vm66, %v1443, 0.0
    %v1476 = vsel %vm66, %v1445, 0.0
    %v1477 = vadd.f32 %v1475, %v1476
    %v1478 = vsel %vm66, %v1447, 0.0
    %v1479 = vadd.f32 %v1477, %v1478
    %v1480 = vsel %vm66, %v1449, 0.0
    %v1481 = vadd.f32 %v1479, %v1480
    %v1482 = vsel %vm66, %v1451, 0.0
    %v1483 = vadd.f32 %v1481, %v1482
    %v1484 = vsel %vm66, %v1453, 0.0
    %v1485 = vadd.f32 %v1483, %v1484
    %v1486 = vsel %vm66, %v1455, 0.0
    %v1487 = vadd.f32 %v1485, %v1486
    %v1488 = vsel %vm66, %v1457, 0.0
    %v1489 = vadd.f32 %v1487, %v1488
    %v1490 = vsel %vm66, %v1444, 0.0
    %v1491 = vsel %vm66, %v1446, 0.0
    %v1492 = vadd.f32 %v1490, %v1491
    %v1493 = vsel %vm66, %v1448, 0.0
    %v1494 = vadd.f32 %v1492, %v1493
    %v1495 = vsel %vm66, %v1450, 0.0
    %v1496 = vadd.f32 %v1494, %v1495
    %v1497 = vsel %vm66, %v1452, 0.0
    %v1498 = vadd.f32 %v1496, %v1497
    %v1499 = vsel %vm66, %v1454, 0.0
    %v1500 = vadd.f32 %v1498, %v1499
    %v1501 = vsel %vm66, %v1456, 0.0
    %v1502 = vadd.f32 %v1500, %v1501
    %v1503 = vsel %vm66, %v1458, 0.0
    %v1504 = vadd.f32 %v1502, %v1503
    %v1505 = vsel %vm66, %v1459, 0.0
    %v1506 = vsel %vm66, %v1461, 0.0
    %v1507 = vadd.f32 %v1505, %v1506
    %v1508 = vsel %vm66, %v1463, 0.0
    %v1509 = vadd.f32 %v1507, %v1508
    %v1510 = vsel %vm66, %v1465, 0.0
    %v1511 = vadd.f32 %v1509, %v1510
    %v1512 = vsel %vm66, %v1467, 0.0
    %v1513 = vadd.f32 %v1511, %v1512
    %v1514 = vsel %vm66, %v1469, 0.0
    %v1515 = vadd.f32 %v1513, %v1514
    %v1516 = vsel %vm66, %v1471, 0.0
    %v1517 = vadd.f32 %v1515, %v1516
    %v1518 = vsel %vm66, %v1473, 0.0
    %v1519 = vadd.f32 %v1517, %v1518
    %v1520 = vsel %vm66, %v1460, 0.0
    %v1521 = vsel %vm66, %v1462, 0.0
    %v1522 = vadd.f32 %v1520, %v1521
    %v1523 = vsel %vm66, %v1464, 0.0
    %v1524 = vadd.f32 %v1522, %v1523
    %v1525 = vsel %vm66, %v1466, 0.0
    %v1526 = vadd.f32 %v1524, %v1525
    %v1527 = vsel %vm66, %v1468, 0.0
    %v1528 = vadd.f32 %v1526, %v1527
    %v1529 = vsel %vm66, %v1470, 0.0
    %v1530 = vadd.f32 %v1528, %v1529
    %v1531 = vsel %vm66, %v1472, 0.0
    %v1532 = vadd.f32 %v1530, %v1531
    %v1533 = vsel %vm66, %v1474, 0.0
    %v1534 = vadd.f32 %v1532, %v1533
    %v1535 = vld [vmem:[%s4] sm:$0xff]
    %v1536 = vld [vmem:[%s4 + $0x8] sm:$0xff]
    %v1537 = vld [vmem:[%s4 + $0x10] sm:$0xff]
    %v1538 = vld [vmem:[%s4 + $0x18] sm:$0xff]
    %v1539 = vld [vmem:[%s5] sm:$0x1]
    %v1541 = vlaneseq
    %v1542 = vshrl.u32 %v1541, 7
    %v1543 = vsub.s32 0, %v1542
    %v1544 = vrot.slane %v1539, %v1543
    %v1547 = vsel %vm66, %v1489, 0
    %v1550 = vsel %vm66, %v1504, 0
    %v1553 = vsel %vm66, %v1519, 0
    %v1556 = vsel %vm66, %v1534, 0
    %1558 = vmatprep.subr.mxu0 0.0
    %1559 = vmatpush1.msra.mxu0 %v1535
    %1560 = vmatprep.subr.mxu0 0.0
    %1561 = vmatpush1.msra.mxu0 %v1536
    %1562 = vmatprep.subr.mxu0 0.0
    %1563 = vmatpush1.msra.mxu0 %v1537
    %1564 = vmatprep.subr.mxu0 0.0
    %1565 = vmatpush1.msra.mxu0 %v1538
    %1566 = vmatprep.subr.mxu0 0.0
    %1567 = vmatpush1.msra.mxu0 0.0
    %1568 = vmatprep.subr.mxu0 0.0
    %1569 = vmatpush1.msra.mxu0 0.0
    %1570 = vmatprep.subr.mxu0 0.0
    %1571 = vmatpush1.msra.mxu0 0.0
    %1572 = vmatprep.subr.mxu0 0.0
    %1573 = vmatpush1.msra.mxu0 0.0
    %1574 = vmatprep.subr.mxu0 0.0
    %1575 = vmatpush1.msra.mxu0 0.0
    %1576 = vmatprep.subr.mxu0 0.0
    %1577 = vmatpush1.msra.mxu0 0.0
    %1578 = vmatprep.subr.mxu0 0.0
    %1579 = vmatpush1.msra.mxu0 0.0
    %1580 = vmatprep.subr.mxu0 0.0
    %1581 = vmatpush1.msra.mxu0 0.0
    %1582 = vmatprep.subr.mxu0 0.0
    %1583 = vmatpush1.msra.mxu0 0.0
    %1584 = vmatprep.subr.mxu0 0.0
    %1585 = vmatpush1.msra.mxu0 0.0
    %1586 = vmatprep.subr.mxu0 0.0
    %1587 = vmatpush1.msra.mxu0 0.0
    %1588 = vmatprep.subr.mxu0 0.0
    %1589 = vmatpush1.msra.mxu0 0.0
    %1590 = vmatprep.subr.mxu0 0.0
    %1591 = vmatpush1.msra.mxu0 0.0
    %1592 = vmatprep.subr.mxu0 0.0
    %1593 = vmatpush1.msra.mxu0 0.0
    %1594 = vmatprep.subr.mxu0 0.0
    %1595 = vmatpush1.msra.mxu0 0.0
    %1596 = vmatprep.subr.mxu0 0.0
    %1597 = vmatpush1.msra.mxu0 0.0
    %1598 = vmatprep.subr.mxu0 0.0
    %1599 = vmatpush1.msra.mxu0 0.0
    %1600 = vmatprep.subr.mxu0 0.0
    %1601 = vmatpush1.msra.mxu0 0.0
    %1602 = vmatprep.subr.mxu0 0.0
    %1603 = vmatpush1.msra.mxu0 0.0
    %1604 = vmatprep.subr.mxu0 0.0
    %1605 = vmatpush1.msra.mxu0 0.0
    %1606 = vmatprep.subr.mxu0 0.0
    %1607 = vmatpush1.msra.mxu0 0.0
    %1608 = vmatprep.subr.mxu0 0.0
    %1609 = vmatpush1.msra.mxu0 0.0
    %1610 = vmatprep.subr.mxu0 0.0
    %1611 = vmatpush1.msra.mxu0 0.0
    %1612 = vmatprep.subr.mxu0 0.0
    %1613 = vmatpush1.msra.mxu0 0.0
    %1614 = vmatprep.subr.mxu0 0.0
    %1615 = vmatpush1.msra.mxu0 0.0
    %1616 = vmatprep.subr.mxu0 0.0
    %1617 = vmatpush1.msra.mxu0 0.0
    %1618 = vmatprep.subr.mxu0 0.0
    %1619 = vmatpush1.msra.mxu0 0.0
    %1620 = vmatprep.subr.mxu0 0.0
    %1621 = vmatpush1.msra.mxu0 0.0
    %1622 = vmatprep.mubr.f32.mxu0 0.0
    %1623 = vmatmul.mubr.f32.gmra.mrb[0].mxu0 %v1547
    %v1624 = vpop.f32.mrb[0].mxu0
    %v1625 = vadd.f32 %v1544, %v1624
    %v1626 = vpop.f32.mrb[0].mxu0
    %1627 = vmatprep.mubr.f32.mxu0 0.0
    %1628 = vmatmul.mubr.f32.gmra.mrb[0].mxu0 %v1550
    %v1629 = vpop.f32.mrb[0].mxu0
    %v1630 = vadd.f32 %v1544, %v1629
    %v1631 = vpop.f32.mrb[0].mxu0
    %1632 = vmatprep.mubr.f32.mxu0 0.0
    %1633 = vmatmul.mubr.f32.gmra.mrb[0].mxu0 %v1553
    %v1634 = vpop.f32.mrb[0].mxu0
    %v1635 = vadd.f32 %v1544, %v1634
    %v1636 = vpop.f32.mrb[0].mxu0
    %1637 = vmatprep.mubr.f32.mxu0 0.0
    %1638 = vmatmul.mubr.f32.gmra.mrb[0].mxu0 %v1556
    %v1639 = vpop.f32.mrb[0].mxu0
    %v1640 = vadd.f32 %v1544, %v1639
    %v1641 = vpop.f32.mrb[0].mxu0
    %1642 = vdwg.mxu0
    %v1643 = vadd.f32 %v50, %v1625
    %v1644 = vadd.f32 %v51, %v1630
    %v1645 = vadd.f32 %v52, %v1635
    %v1646 = vadd.f32 %v53, %v1640
    %v1647 = vld [vmem:[%s6] sm:$0x1]
    %v1648 = vld [vmem:[%s7] sm:$0x1]
    %v1649 = vsel %vm66, %v1643, 0.0
    %1650 = vadd.xlane.f32.xlu0 %v1649
    %v1651 = vpop.xlane.xlu0 %1650
    %v1652 = vsel %vm66, %v1644, 0.0
    %1653 = vadd.xlane.f32.xlu0 %v1652
    %v1654 = vpop.xlane.xlu0 %1653
    %v1655 = vsel %vm66, %v1645, 0.0
    %1656 = vadd.xlane.f32.xlu0 %v1655
    %v1657 = vpop.xlane.xlu0 %1656
    %v1658 = vsel %vm66, %v1646, 0.0
    %1659 = vadd.xlane.f32.xlu0 %v1658
    %v1660 = vpop.xlane.xlu0 %1659
    %v1661 = vrcp.pop 32.0
    %v1662 = vmul.f32 %v1651, %v1661
    %v1663 = vmul.f32 %v1654, %v1661
    %v1664 = vmul.f32 %v1657, %v1661
    %v1665 = vmul.f32 %v1660, %v1661
    %v1666 = vsub.f32 %v1643, %v1662
    %v1667 = vsub.f32 %v1644, %v1663
    %v1668 = vsub.f32 %v1645, %v1664
    %v1669 = vsub.f32 %v1646, %v1665
    %v1670 = vmul.f32 %v1666, %v1666
    %v1671 = vmul.f32 %v1667, %v1667
    %v1672 = vmul.f32 %v1668, %v1668
    %v1673 = vmul.f32 %v1669, %v1669
    %v1674 = vsel %vm66, %v1670, 0.0
    %1675 = vadd.xlane.f32.xlu0 %v1674
    %v1676 = vpop.xlane.xlu0 %1675
    %v1677 = vsel %vm66, %v1671, 0.0
    %1678 = vadd.xlane.f32.xlu0 %v1677
    %v1679 = vpop.xlane.xlu0 %1678
    %v1680 = vsel %vm66, %v1672, 0.0
    %1681 = vadd.xlane.f32.xlu0 %v1680
    %v1682 = vpop.xlane.xlu0 %1681
    %v1683 = vsel %vm66, %v1673, 0.0
    %1684 = vadd.xlane.f32.xlu0 %v1683
    %v1685 = vpop.xlane.xlu0 %1684
    %v1686 = vmul.f32 %v1676, %v1661
    %v1687 = vmul.f32 %v1679, %v1661
    %v1688 = vmul.f32 %v1682, %v1661
    %v1689 = vmul.f32 %v1685, %v1661
    %v1690 = vadd.f32 %v1686, 1e-05
    %v1691 = vadd.f32 %v1687, 1e-05
    %v1692 = vadd.f32 %v1688, 1e-05
    %v1693 = vadd.f32 %v1689, 1e-05
    %v1694 = vrsqrt.pop %v1690
    %v1695 = vrsqrt.pop %v1691
    %v1696 = vrsqrt.pop %v1692
    %v1697 = vrsqrt.pop %v1693
    %v1698 = vmul.f32 %v1666, %v1694
    %v1699 = vmul.f32 %v1667, %v1695
    %v1700 = vmul.f32 %v1668, %v1696
    %v1701 = vmul.f32 %v1669, %v1697
    %v1703 = vlaneseq
    %v1704 = vshrl.u32 %v1703, 7
    %v1705 = vsub.s32 0, %v1704
    %v1706 = vrot.slane %v1647, %v1705
    %v1708 = vmul.f32 %v1698, %v1706
    %v1709 = vmul.f32 %v1699, %v1706
    %v1710 = vmul.f32 %v1700, %v1706
    %v1711 = vmul.f32 %v1701, %v1706
    %v1713 = vlaneseq
    %v1714 = vshrl.u32 %v1713, 7
    %v1715 = vsub.s32 0, %v1714
    %v1716 = vrot.slane %v1648, %v1715
    %v1718 = vadd.f32 %v1708, %v1716
    %v1719 = vadd.f32 %v1709, %v1716
    %v1720 = vadd.f32 %v1710, %v1716
    %v1721 = vadd.f32 %v1711, %v1716
    %v1722 = vld [vmem:[%s8] sm:$0xff]
    %v1723 = vld [vmem:[%s8 + $0x8] sm:$0xff]
    %v1724 = vld [vmem:[%s8 + $0x10] sm:$0xff]
    %v1725 = vld [vmem:[%s8 + $0x18] sm:$0xff]
    %v1726 = vld [vmem:[%s9] sm:$0x1]
    %v1728 = vlaneseq
    %v1729 = vshrl.u32 %v1728, 7
    %v1730 = vsub.s32 0, %v1729
    %v1731 = vrot.slane %v1726, %v1730
    %v1734 = vsel %vm66, %v1718, 0
    %v1737 = vsel %vm66, %v1719, 0
    %v1740 = vsel %vm66, %v1720, 0
    %v1743 = vsel %vm66, %v1721, 0
    %1745 = vmatprep.subr.mxu0 0.0
    %1746 = vmatpush1.msra.mxu0 %v1722
    %1747 = vmatprep.subr.mxu0 0.0
    %1748 = vmatpush1.msra.mxu0 %v1723
    %1749 = vmatprep.subr.mxu0 0.0
    %1750 = vmatpush1.msra.mxu0 %v1724
    %1751 = vmatprep.subr.mxu0 0.0
    %1752 = vmatpush1.msra.mxu0 %v1725
    %1753 = vmatprep.subr.mxu0 0.0
    %1754 = vmatpush1.msra.mxu0 0.0
    %1755 = vmatprep.subr.mxu0 0.0
    %1756 = vmatpush1.msra.mxu0 0.0
    %1757 = vmatprep.subr.mxu0 0.0
    %1758 = vmatpush1.msra.mxu0 0.0
    %1759 = vmatprep.subr.mxu0 0.0
    %1760 = vmatpush1.msra.mxu0 0.0
    %1761 = vmatprep.subr.mxu0 0.0
    %1762 = vmatpush1.msra.mxu0 0.0
    %1763 = vmatprep.subr.mxu0 0.0
    %1764 = vmatpush1.msra.mxu0 0.0
    %1765 = vmatprep.subr.mxu0 0.0
    %1766 = vmatpush1.msra.mxu0 0.0
    %1767 = vmatprep.subr.mxu0 0.0
    %1768 = vmatpush1.msra.mxu0 0.0
    %1769 = vmatprep.subr.mxu0 0.0
    %1770 = vmatpush1.msra.mxu0 0.0
    %1771 = vmatprep.subr.mxu0 0.0
    %1772 = vmatpush1.msra.mxu0 0.0
    %1773 = vmatprep.subr.mxu0 0.0
    %1774 = vmatpush1.msra.mxu0 0.0
    %1775 = vmatprep.subr.mxu0 0.0
    %1776 = vmatpush1.msra.mxu0 0.0
    %1777 = vmatprep.subr.mxu0 0.0
    %1778 = vmatpush1.msra.mxu0 0.0
    %1779 = vmatprep.subr.mxu0 0.0
    %1780 = vmatpush1.msra.mxu0 0.0
    %1781 = vmatprep.subr.mxu0 0.0
    %1782 = vmatpush1.msra.mxu0 0.0
    %1783 = vmatprep.subr.mxu0 0.0
    %1784 = vmatpush1.msra.mxu0 0.0
    %1785 = vmatprep.subr.mxu0 0.0
    %1786 = vmatpush1.msra.mxu0 0.0
    %1787 = vmatprep.subr.mxu0 0.0
    %1788 = vmatpush1.msra.mxu0 0.0
    %1789 = vmatprep.subr.mxu0 0.0
    %1790 = vmatpush1.msra.mxu0 0.0
    %1791 = vmatprep.subr.mxu0 0.0
    %1792 = vmatpush1.msra.mxu0 0.0
    %1793 = vmatprep.subr.mxu0 0.0
    %1794 = vmatpush1.msra.mxu0 0.0
    %1795 = vmatprep.subr.mxu0 0.0
    %1796 = vmatpush1.msra.mxu0 0.0
    %1797 = vmatprep.subr.mxu0 0.0
    %1798 = vmatpush1.msra.mxu0 0.0
    %1799 = vmatprep.subr.mxu0 0.0
    %1800 = vmatpush1.msra.mxu0 0.0
    %1801 = vmatprep.subr.mxu0 0.0
    %1802 = vmatpush1.msra.mxu0 0.0
    %1803 = vmatprep.subr.mxu0 0.0
    %1804 = vmatpush1.msra.mxu0 0.0
    %1805 = vmatprep.subr.mxu0 0.0
    %1806 = vmatpush1.msra.mxu0 0.0
    %1807 = vmatprep.subr.mxu0 0.0
    %1808 = vmatpush1.msra.mxu0 0.0
    %1809 = vmatprep.mubr.f32.mxu0 0.0
    %1810 = vmatmul.mubr.f32.gmra.mrb[0].mxu0 %v1734
    %v1811 = vpop.f32.mrb[0].mxu0
    %v1812 = vadd.f32 %v1731, %v1811
    %v1813 = vpop.f32.mrb[0].mxu0
    %1814 = vmatprep.mubr.f32.mxu0 0.0
    %1815 = vmatmul.mubr.f32.gmra.mrb[0].mxu0 %v1737
    %v1816 = vpop.f32.mrb[0].mxu0
    %v1817 = vadd.f32 %v1731, %v1816
    %v1818 = vpop.f32.mrb[0].mxu0
    %1819 = vmatprep.mubr.f32.mxu0 0.0
    %1820 = vmatmul.mubr.f32.gmra.mrb[0].mxu0 %v1740
    %v1821 = vpop.f32.mrb[0].mxu0
    %v1822 = vadd.f32 %v1731, %v1821
    %v1823 = vpop.f32.mrb[0].mxu0
    %1824 = vmatprep.mubr.f32.mxu0 0.0
    %1825 = vmatmul.mubr.f32.gmra.mrb[0].mxu0 %v1743
    %v1826 = vpop.f32.mrb[0].mxu0
    %v1827 = vadd.f32 %v1731, %v1826
    %v1828 = vpop.f32.mrb[0].mxu0
    %1829 = vdwg.mxu0
    %v1830 = vmax.f32 %v1812, 0.0
    %v1831 = vmax.f32 %v1817, 0.0
    %v1832 = vmax.f32 %v1822, 0.0
    %v1833 = vmax.f32 %v1827, 0.0
    %v1834 = vld [vmem:[%s10] sm:$0xff]
    %v1835 = vld [vmem:[%s10 + $0x8] sm:$0xff]
    %v1836 = vld [vmem:[%s10 + $0x10] sm:$0xff]
    %v1837 = vld [vmem:[%s10 + $0x18] sm:$0xff]
    %v1838 = vld [vmem:[%s10 + $0x20] sm:$0xff]
    %v1839 = vld [vmem:[%s10 + $0x28] sm:$0xff]
    %v1840 = vld [vmem:[%s10 + $0x30] sm:$0xff]
    %v1841 = vld [vmem:[%s10 + $0x38] sm:$0xff]
    %v1842 = vld [vmem:[%s10 + $0x40] sm:$0xff]
    %v1843 = vld [vmem:[%s10 + $0x48] sm:$0xff]
    %v1844 = vld [vmem:[%s10 + $0x50] sm:$0xff]
    %v1845 = vld [vmem:[%s10 + $0x58] sm:$0xff]
    %v1846 = vld [vmem:[%s10 + $0x60] sm:$0xff]
    %v1847 = vld [vmem:[%s10 + $0x68] sm:$0xff]
    %v1848 = vld [vmem:[%s10 + $0x70] sm:$0xff]
    %v1849 = vld [vmem:[%s10 + $0x78] sm:$0xff]
    %v1850 = vld [vmem:[%s11] sm:$0x1]
    %v1852 = vlaneseq
    %v1853 = vshrl.u32 %v1852, 7
    %v1854 = vsub.s32 0, %v1853
    %v1855 = vrot.slane %v1850, %v1854
    %1857 = vmatprep.subr.mxu0 0.0
    %1858 = vmatpush1.msra.mxu0 %v1834
    %1859 = vmatprep.subr.mxu0 0.0
    %1860 = vmatpush1.msra.mxu0 %v1835
    %1861 = vmatprep.subr.mxu0 0.0
    %1862 = vmatpush1.msra.mxu0 %v1836
    %1863 = vmatprep.subr.mxu0 0.0
    %1864 = vmatpush1.msra.mxu0 %v1837
    %1865 = vmatprep.subr.mxu0 0.0
    %1866 = vmatpush1.msra.mxu0 %v1838
    %1867 = vmatprep.subr.mxu0 0.0
    %1868 = vmatpush1.msra.mxu0 %v1839
    %1869 = vmatprep.subr.mxu0 0.0
    %1870 = vmatpush1.msra.mxu0 %v1840
    %1871 = vmatprep.subr.mxu0 0.0
    %1872 = vmatpush1.msra.mxu0 %v1841
    %1873 = vmatprep.subr.mxu0 0.0
    %1874 = vmatpush1.msra.mxu0 %v1842
    %1875 = vmatprep.subr.mxu0 0.0
    %1876 = vmatpush1.msra.mxu0 %v1843
    %1877 = vmatprep.subr.mxu0 0.0
    %1878 = vmatpush1.msra.mxu0 %v1844
    %1879 = vmatprep.subr.mxu0 0.0
    %1880 = vmatpush1.msra.mxu0 %v1845
    %1881 = vmatprep.subr.mxu0 0.0
    %1882 = vmatpush1.msra.mxu0 %v1846
    %1883 = vmatprep.subr.mxu0 0.0
    %1884 = vmatpush1.msra.mxu0 %v1847
    %1885 = vmatprep.subr.mxu0 0.0
    %1886 = vmatpush1.msra.mxu0 %v1848
    %1887 = vmatprep.subr.mxu0 0.0
    %1888 = vmatpush1.msra.mxu0 %v1849
    %1889 = vmatprep.subr.mxu0 0.0
    %1890 = vmatpush1.msra.mxu0 0.0
    %1891 = vmatprep.subr.mxu0 0.0
    %1892 = vmatpush1.msra.mxu0 0.0
    %1893 = vmatprep.subr.mxu0 0.0
    %1894 = vmatpush1.msra.mxu0 0.0
    %1895 = vmatprep.subr.mxu0 0.0
    %1896 = vmatpush1.msra.mxu0 0.0
    %1897 = vmatprep.subr.mxu0 0.0
    %1898 = vmatpush1.msra.mxu0 0.0
    %1899 = vmatprep.subr.mxu0 0.0
    %1900 = vmatpush1.msra.mxu0 0.0
    %1901 = vmatprep.subr.mxu0 0.0
    %1902 = vmatpush1.msra.mxu0 0.0
    %1903 = vmatprep.subr.mxu0 0.0
    %1904 = vmatpush1.msra.mxu0 0.0
    %1905 = vmatprep.subr.mxu0 0.0
    %1906 = vmatpush1.msra.mxu0 0.0
    %1907 = vmatprep.subr.mxu0 0.0
    %1908 = vmatpush1.msra.mxu0 0.0
    %1909 = vmatprep.subr.mxu0 0.0
    %1910 = vmatpush1.msra.mxu0 0.0
    %1911 = vmatprep.subr.mxu0 0.0
    %1912 = vmatpush1.msra.mxu0 0.0
    %1913 = vmatprep.subr.mxu0 0.0
    %1914 = vmatpush1.msra.mxu0 0.0
    %1915 = vmatprep.subr.mxu0 0.0
    %1916 = vmatpush1.msra.mxu0 0.0
    %1917 = vmatprep.subr.mxu0 0.0
    %1918 = vmatpush1.msra.mxu0 0.0
    %1919 = vmatprep.subr.mxu0 0.0
    %1920 = vmatpush1.msra.mxu0 0.0
    %1921 = vmatprep.mubr.f32.mxu0 0.0
    %1922 = vmatmul.mubr.f32.gmra.mrb[0].mxu0 %v1830
    %v1923 = vpop.f32.mrb[0].mxu0
    %v1924 = vadd.f32 %v1855, %v1923
    %v1925 = vpop.f32.mrb[0].mxu0
    %1926 = vmatprep.mubr.f32.mxu0 0.0
    %1927 = vmatmul.mubr.f32.gmra.mrb[0].mxu0 %v1831
    %v1928 = vpop.f32.mrb[0].mxu0
    %v1929 = vadd.f32 %v1855, %v1928
    %v1930 = vpop.f32.mrb[0].mxu0
    %1931 = vmatprep.mubr.f32.mxu0 0.0
    %1932 = vmatmul.mubr.f32.gmra.mrb[0].mxu0 %v1832
    %v1933 = vpop.f32.mrb[0].mxu0
    %v1934 = vadd.f32 %v1855, %v1933
    %v1935 = vpop.f32.mrb[0].mxu0
    %1936 = vmatprep.mubr.f32.mxu0 0.0
    %1937 = vmatmul.mubr.f32.gmra.mrb[0].mxu0 %v1833
    %v1938 = vpop.f32.mrb[0].mxu0
    %v1939 = vadd.f32 %v1855, %v1938
    %v1940 = vpop.f32.mrb[0].mxu0
    %1941 = vdwg.mxu0
    %v1942 = vadd.f32 %v1718, %v1924
    %v1943 = vadd.f32 %v1719, %v1929
    %v1944 = vadd.f32 %v1720, %v1934
    %v1945 = vadd.f32 %v1721, %v1939
    %v1946 = vld [vmem:[%s12] sm:$0x1]
    %v1947 = vld [vmem:[%s13] sm:$0x1]
    %v1948 = vsel %vm66, %v1942, 0.0
    %1949 = vadd.xlane.f32.xlu0 %v1948
    %v1950 = vpop.xlane.xlu0 %1949
    %v1951 = vsel %vm66, %v1943, 0.0
    %1952 = vadd.xlane.f32.xlu0 %v1951
    %v1953 = vpop.xlane.xlu0 %1952
    %v1954 = vsel %vm66, %v1944, 0.0
    %1955 = vadd.xlane.f32.xlu0 %v1954
    %v1956 = vpop.xlane.xlu0 %1955
    %v1957 = vsel %vm66, %v1945, 0.0
    %1958 = vadd.xlane.f32.xlu0 %v1957
    %v1959 = vpop.xlane.xlu0 %1958
    %v1960 = vmul.f32 %v1950, %v1661
    %v1961 = vmul.f32 %v1953, %v1661
    %v1962 = vmul.f32 %v1956, %v1661
    %v1963 = vmul.f32 %v1959, %v1661
    %v1964 = vsub.f32 %v1942, %v1960
    %v1965 = vsub.f32 %v1943, %v1961
    %v1966 = vsub.f32 %v1944, %v1962
    %v1967 = vsub.f32 %v1945, %v1963
    %v1968 = vmul.f32 %v1964, %v1964
    %v1969 = vmul.f32 %v1965, %v1965
    %v1970 = vmul.f32 %v1966, %v1966
    %v1971 = vmul.f32 %v1967, %v1967
    %v1972 = vsel %vm66, %v1968, 0.0
    %1973 = vadd.xlane.f32.xlu0 %v1972
    %v1974 = vpop.xlane.xlu0 %1973
    %v1975 = vsel %vm66, %v1969, 0.0
    %1976 = vadd.xlane.f32.xlu0 %v1975
    %v1977 = vpop.xlane.xlu0 %1976
    %v1978 = vsel %vm66, %v1970, 0.0
    %1979 = vadd.xlane.f32.xlu0 %v1978
    %v1980 = vpop.xlane.xlu0 %1979
    %v1981 = vsel %vm66, %v1971, 0.0
    %1982 = vadd.xlane.f32.xlu0 %v1981
    %v1983 = vpop.xlane.xlu0 %1982
    %v1984 = vmul.f32 %v1974, %v1661
    %v1985 = vmul.f32 %v1977, %v1661
    %v1986 = vmul.f32 %v1980, %v1661
    %v1987 = vmul.f32 %v1983, %v1661
    %v1988 = vadd.f32 %v1984, 1e-05
    %v1989 = vadd.f32 %v1985, 1e-05
    %v1990 = vadd.f32 %v1986, 1e-05
    %v1991 = vadd.f32 %v1987, 1e-05
    %v1992 = vrsqrt.pop %v1988
    %v1993 = vrsqrt.pop %v1989
    %v1994 = vrsqrt.pop %v1990
    %v1995 = vrsqrt.pop %v1991
    %v1996 = vmul.f32 %v1964, %v1992
    %v1997 = vmul.f32 %v1965, %v1993
    %v1998 = vmul.f32 %v1966, %v1994
    %v1999 = vmul.f32 %v1967, %v1995
    %v2001 = vlaneseq
    %v2002 = vshrl.u32 %v2001, 7
    %v2003 = vsub.s32 0, %v2002
    %v2004 = vrot.slane %v1946, %v2003
    %v2006 = vmul.f32 %v1996, %v2004
    %v2007 = vmul.f32 %v1997, %v2004
    %v2008 = vmul.f32 %v1998, %v2004
    %v2009 = vmul.f32 %v1999, %v2004
    %v2011 = vlaneseq
    %v2012 = vshrl.u32 %v2011, 7
    %v2013 = vsub.s32 0, %v2012
    %v2014 = vrot.slane %v1947, %v2013
    %v2016 = vadd.f32 %v2006, %v2014
    %v2017 = vadd.f32 %v2007, %v2014
    %v2018 = vadd.f32 %v2008, %v2014
    %v2019 = vadd.f32 %v2009, %v2014
    %2020 = vst.msk [vmem:[#allocation2] sm:$0xff] %vm66, %v2016
    %2021 = vst.msk [vmem:[#allocation2 + $0x8] sm:$0xff] %vm66, %v2017
    %2022 = vst.msk [vmem:[#allocation2 + $0x10] sm:$0xff] %vm66, %v2018
    %2023 = vst.msk [vmem:[#allocation2 + $0x18] sm:$0xff] %vm66, %v2019
    %v2024 = vsel %vm692, %v1013, 0.0
    %v2025 = vsel %vm692, %v1015, 0.0
    %v2026 = vadd.f32 %v2024, %v2025
    %v2027 = vsel %vm692, %v1017, 0.0
    %v2028 = vadd.f32 %v2026, %v2027
    %v2029 = vsel %vm692, %v1019, 0.0
    %v2030 = vadd.f32 %v2028, %v2029
    %v2031 = vsel %vm692, %v1021, 0.0
    %v2032 = vadd.f32 %v2030, %v2031
    %v2033 = vsel %vm692, %v1023, 0.0
    %v2034 = vadd.f32 %v2032, %v2033
    %v2035 = vsel %vm692, %v1025, 0.0
    %v2036 = vadd.f32 %v2034, %v2035
    %v2037 = vsel %vm692, %v1027, 0.0
    %v2038 = vadd.f32 %v2036, %v2037
    %v2039 = vsel %vm692, %v1014, 0.0
    %v2040 = vsel %vm692, %v1016, 0.0
    %v2041 = vadd.f32 %v2039, %v2040
    %v2042 = vsel %vm692, %v1018, 0.0
    %v2043 = vadd.f32 %v2041, %v2042
    %v2044 = vsel %vm692, %v1020, 0.0
    %v2045 = vadd.f32 %v2043, %v2044
    %v2046 = vsel %vm692, %v1022, 0.0
    %v2047 = vadd.f32 %v2045, %v2046
    %v2048 = vsel %vm692, %v1024, 0.0
    %v2049 = vadd.f32 %v2047, %v2048
    %v2050 = vsel %vm692, %v1026, 0.0
    %v2051 = vadd.f32 %v2049, %v2050
    %v2052 = vsel %vm692, %v1028, 0.0
    %v2053 = vadd.f32 %v2051, %v2052
    %v2054 = vsel %vm692, %v1029, 0.0
    %v2055 = vsel %vm692, %v1031, 0.0
    %v2056 = vadd.f32 %v2054, %v2055
    %v2057 = vsel %vm692, %v1033, 0.0
    %v2058 = vadd.f32 %v2056, %v2057
    %v2059 = vsel %vm692, %v1035, 0.0
    %v2060 = vadd.f32 %v2058, %v2059
    %v2061 = vsel %vm692, %v1037, 0.0
    %v2062 = vadd.f32 %v2060, %v2061
    %v2063 = vsel %vm692, %v1039, 0.0
    %v2064 = vadd.f32 %v2062, %v2063
    %v2065 = vsel %vm692, %v1041, 0.0
    %v2066 = vadd.f32 %v2064, %v2065
    %v2067 = vsel %vm692, %v1043, 0.0
    %v2068 = vadd.f32 %v2066, %v2067
    %v2069 = vsel %vm692, %v1030, 0.0
    %v2070 = vsel %vm692, %v1032, 0.0
    %v2071 = vadd.f32 %v2069, %v2070
    %v2072 = vsel %vm692, %v1034, 0.0
    %v2073 = vadd.f32 %v2071, %v2072
    %v2074 = vsel %vm692, %v1036, 0.0
    %v2075 = vadd.f32 %v2073, %v2074
    %v2076 = vsel %vm692, %v1038, 0.0
    %v2077 = vadd.f32 %v2075, %v2076
    %v2078 = vsel %vm692, %v1040, 0.0
    %v2079 = vadd.f32 %v2077, %v2078
    %v2080 = vsel %vm692, %v1042, 0.0
    %v2081 = vadd.f32 %v2079, %v2080
    %v2082 = vsel %vm692, %v1044, 0.0
    %v2083 = vadd.f32 %v2081, %v2082
    %v2084 = vmul.f32 %v2038, 0.125
    %v2085 = vmul.f32 %v2053, 0.125
    %v2086 = vmul.f32 %v2068, 0.125
    %v2087 = vmul.f32 %v2083, 0.125
    %2088 = vst.msk [vmem:[%s15] sm:$0xff] %vm692, %v2084
    %2089 = vst.msk [vmem:[%s15 + $0x8] sm:$0xff] %vm692, %v2085
    %2090 = vst.msk [vmem:[%s15 + $0x10] sm:$0xff] %vm692, %v2086
    %2091 = vst.msk [vmem:[%s15 + $0x18] sm:$0xff] %vm692, %v2087
    // Predicated region
    $region58: #{tpu_custom_call.1} parent=1 // pred_check
      _
    $region59: #{tpu_custom_call.1} parent=1 // pred_check_branch
      %2093 = sbr.rel (0) target = $region61
    $region60: #{tpu_custom_call.1} parent=1 // pred_region
      %s2095 = ssub.s32 512, 512
      %2096 = vsyncadd [#allocation3], %s2095
      %s2097 = sshll.u32 [#allocation2], 4
      %s2098 = int_to_ptr.vmem [resolvable:$true] %s2097
      %2103 = dma.vmem_to_hbm [thread:$0]  %s2098, 512, %s14, [#allocation3], 128, 128, 8
    $region61: #{tpu_custom_call.1} parent=1 // pred_fallthru
      _
    // Predicated region
    $region62: #{tpu_custom_call.1} parent=1 // pred_check
      _
    $region63: #{tpu_custom_call.1} parent=1 // pred_check_branch
      %2105 = sbr.rel (0) target = $region65
    $region64: #{tpu_custom_call.1} parent=1 // pred_region
      _
    $region65: #{tpu_custom_call.1} parent=1 // pred_fallthru
      _
    // Predicated region
    $region66: #{tpu_custom_call.1} parent=1 // pred_check
      _
    $region67: #{tpu_custom_call.1} parent=1 // pred_check_branch
      %2107 = sbr.rel (0) target = $region69
    $region68: #{tpu_custom_call.1} parent=1 // pred_region
      %2108 = dma.done [#allocation3], 512
    $region69: #{tpu_custom_call.1} parent=1 // pred_fallthru
      _
    // Predicated region
    $region70: #{tpu_custom_call.1} parent=1 // pred_check
      _
    $region71: #{tpu_custom_call.1} parent=1 // pred_check_branch
      %2110 = sbr.rel (0) target = $region73
    $region72: #{tpu_custom_call.1} parent=1 // pred_region
      _
    $region73: #{tpu_custom_call.1} parent=1 // pred_fallthru
      _
    %2111 = vsyncpa [#allocation3], 1

</llo_original>
